<compile_context>
chip_gen: v6e
topology: v6e:2x2x1
jax: 0.10.0
libtpu: 0.0.40
codegen_flags: <defaults>
</compile_context>

<pallas_src>
import functools
import math

import jax
import jax.numpy as jnp
from jax.experimental import pallas as pl
from jax.experimental.pallas import tpu as pltpu

_LANE = 128
_SUBLANE = 8


def _round_up(x, m):
  return (x + m - 1) // m * m


def _transformer_block_kernel(
    x_ref, act_ref,
    wqkv_ref, bqkv_ref, w1_ref, b1_ref, w2_ref, b2_ref,
    out_ref,
    *, batch_tile, seq_len, num_heads, head_pad):
  """One (batch_tile*seq_len, num_heads*head_pad) row-slab per grid step, fully fused."""
  bt, L, nh, hdp = batch_tile, seq_len, num_heads, head_pad
  Hw = nh * hdp
  rows = bt * L

  x = x_ref[...]                                     # (rows, Hw) f32, head-padded layout
  xb = x.astype(jnp.bfloat16)

  # Fused QKV projection: one (rows, Hw) x (Hw, 3*Hw) MXU matmul, f32 accumulation.
  # 1/sqrt(head_size) is already folded into the Q weight/bias columns.
  qkv = jnp.dot(xb, wqkv_ref[...], preferred_element_type=jnp.float32) + bqkv_ref[...]
  q = qkv[:, :Hw].astype(jnp.bfloat16)               # 128-lane-tile aligned slices (views)
  k = qkv[:, Hw:2 * Hw].astype(jnp.bfloat16)
  v = qkv[:, 2 * Hw:].astype(jnp.bfloat16)

  # Combined causal + active-query mask, built ONCE per grid step, batch order (head, batch).
  row = jax.lax.broadcasted_iota(jnp.int32, (L, L), 0)
  col = jax.lax.broadcasted_iota(jnp.int32, (L, L), 1)
  causal = col <= row                                # one_direction=True -> torch.tril
  act_b = jnp.concatenate([act_ref[...]] * nh, axis=0)            # (nh*rows, 1) f32
  active_q = (act_b > 0.0).reshape(nh * bt, L, 1)                 # masks inactive query rows
  keep = jnp.logical_and(causal[None, :, :], active_q)            # (nh*bt, L, L)

  def split_heads(t):
    # (rows, Hw) -> (nh*bt, L, hdp): lane-tile-aligned slices + leading-dim concat only.
    parts = [t[:, h * hdp:(h + 1) * hdp].reshape(bt, L, hdp) for h in range(nh)]
    return jnp.concatenate(parts, axis=0)

  qh, kh, vh = split_heads(q), split_heads(k), split_heads(v)

  # ONE batched attention over the fused (head, batch) dim instead of a per-head loop.
  s = jnp.einsum('bqd,bkd->bqk', qh, kh, preferred_element_type=jnp.float32)
  s = jnp.where(keep, s, -1e9)                       # single fused select (masked_fill)
  s = s - jnp.max(s, axis=-1, keepdims=True)
  p = jnp.exp(s)
  p = p / jnp.sum(p, axis=-1, keepdims=True)         # exact divide for parity w/ reference
  o = jnp.einsum('bqk,bkd->bqd', p.astype(jnp.bfloat16), vh,
                 preferred_element_type=jnp.float32)               # (nh*bt, L, hdp)

  # Merge heads back to (rows, Hw): leading-dim slices + 128-lane-tile aligned concat
  # (no narrow lane packing, no scratch round-trip, padded lanes stay exactly zero).
  attn = jnp.concatenate(
      [o[h * bt:(h + 1) * bt].reshape(rows, hdp) for h in range(nh)], axis=-1)

  h1 = x + attn                                      # residual around self-attention
  h1b = h1.astype(jnp.bfloat16)
  ff = jnp.dot(h1b, w1_ref[...], preferred_element_type=jnp.float32) + b1_ref[...]
  ff = jnp.maximum(ff, 0.0).astype(jnp.bfloat16)     # ReLU
  ff = jnp.dot(ff, w2_ref[...], preferred_element_type=jnp.float32) + b2_ref[...]
  out_ref[...] = h1 + ff                             # residual around feed-forward


def _pick_batch_tile(batch, seq_len_padded, target_rows=256):
  """Fold batch elems per grid step; keep >= 2 grid steps so v7x megacore splits work."""
  bt = max(1, min(batch, target_rows // max(seq_len_padded, 1)))
  if batch >= 2:
    bt = min(bt, batch // 2)
  bt = max(bt, 1)
  while batch % bt:
    bt -= 1
  return bt


def basic_transformer_block(x_vto, x_s, active_entries, params, *, num_heads, head_size):
  """x_vto [B,L,H], x_s [B,H] (unused, see TODO), active_entries [B,L,1]."""
  del x_s  # TODO(synk): abstract BasicTransformerBlock.forward defines no use for x_s.
  B, L, H = x_vto.shape
  nh, hd = num_heads, head_size
  assert nh * hd == H, "residual around self-attention requires num_heads*head_size == hidden"

  d_ff = params["w1"].shape[1]
  hdp = _round_up(hd, _LANE)        # per-head slot width, 128-lane aligned
  Hw = nh * hdp                     # head-padded hidden width
  Dp = _round_up(d_ff, _LANE)
  Lp = _round_up(L, _SUBLANE)       # sublane-aligned sequence length (no bt=B fallback)

  # --- head-padded weight layout: re-index rows/cols so each head owns a 128-lane slot;
  # --- padded rows/cols are zero so padded lanes stay zero end-to-end. ---
  def head_pad_rows(w):             # (nh*hd, C) -> (nh*hdp, C)
    return jnp.pad(w.reshape(nh, hd, -1), ((0, 0), (0, hdp - hd), (0, 0))).reshape(Hw, -1)

  def head_pad_cols(w):             # (R, nh*hd) -> (R, nh*hdp)
    r = w.shape[0]
    return jnp.pad(w.reshape(r, nh, hd), ((0, 0), (0, 0), (0, hdp - hd))).reshape(r, Hw)

  scale = 1.0 / math.sqrt(hd)       # fold scores/sqrt(head_size) into the Q projection
  wq = head_pad_cols(head_pad_rows(params["wq"] * scale))
  wk = head_pad_cols(head_pad_rows(params["wk"]))
  wv = head_pad_cols(head_pad_rows(params["wv"]))
  wqkv = jnp.concatenate([wq, wk, wv], axis=1).astype(jnp.bfloat16)           # (Hw, 3*Hw)
  bqkv = jnp.concatenate([head_pad_cols(params["bq"] * scale),
                          head_pad_cols(params["bk"]),
                          head_pad_cols(params["bv"])], axis=1).astype(jnp.float32)

  w1 = jnp.pad(head_pad_rows(params["w1"]), ((0, 0), (0, Dp - d_ff))).astype(jnp.bfloat16)
  b1 = jnp.pad(params["b1"], ((0, 0), (0, Dp - d_ff))).astype(jnp.float32)
  w2 = jnp.pad(head_pad_cols(params["w2"]), ((0, Dp - d_ff), (0, 0))).astype(jnp.bfloat16)
  b2 = head_pad_cols(params["b2"]).astype(jnp.float32)

  # --- lane-dense, head-padded, flattened activations: (B*Lp, Hw) ---
  x_p = jnp.pad(x_vto.astype(jnp.float32), ((0, 0), (0, Lp - L), (0, 0)))
  x_hp = jnp.pad(x_p.reshape(B, Lp, nh, hd), ((0, 0), (0, 0), (0, 0), (0, hdp - hd)))
  x_flat = x_hp.reshape(B * Lp, Hw)
  act_p = jnp.pad(active_entries.astype(jnp.float32), ((0, 0), (0, Lp - L), (0, 0)))
  act_flat = act_p.reshape(B * Lp, 1)

  bt = _pick_batch_tile(B, Lp)
  rows = bt * Lp
  grid = (B // bt,)

  kernel = functools.partial(
      _transformer_block_kernel, batch_tile=bt, seq_len=Lp,
      num_heads=nh, head_pad=hdp)

  seq_spec = pl.BlockSpec((rows, Hw), lambda i: (i, 0))
  act_spec = pl.BlockSpec((rows, 1), lambda i: (i, 0))

  def full_spec(arr):
    # Whole (small) weight / bias tensor resident in VMEM for every grid step.
    # TODO(synk): use pipeline_mode=pl.Buffered(1) for these loop-invariant specs once
    # verified on this build; default double-buffering only costs a few KiB here.
    return pl.BlockSpec(arr.shape, lambda i: (0, 0))

  weights = [wqkv, bqkv, w1, b1, w2, b2]
  in_specs = [seq_spec, act_spec] + [full_spec(w) for w in weights]

  # Per-step VMEM budget from actual slab sizes (double-buffered x/out slabs, weights,
  # f32/bf16 intermediates), clamped so it stays sane on v7x's 64 MiB physical VMEM.
  weight_bytes = sum(int(w.size) * w.dtype.itemsize for w in weights)
  io_bytes = 2 * 2 * rows * Hw * 4                       # x + out, double buffered, f32
  interm_bytes = rows * (3 * Hw * 6 + 4 * Hw * 6 + 2 * Dp * 6) + 8 * nh * rows * Lp * 4
  vmem_limit = int(min(max(io_bytes + 2 * weight_bytes + interm_bytes, 32 << 20), 100 << 20))

  out_flat = pl.pallas_call(
      kernel,
      out_shape=jax.ShapeDtypeStruct((B * Lp, Hw), jnp.float32),
      grid_spec=pltpu.PrefetchScalarGridSpec(
          num_scalar_prefetch=0,
          grid=grid,
          in_specs=in_specs,
          out_specs=seq_spec),
      compiler_params=pltpu.CompilerParams(
          dimension_semantics=("parallel",),
          vmem_limit_bytes=vmem_limit),
  )(x_flat, act_flat, *weights)

  # Drop head padding and L padding in the wrapper.
  return out_flat.reshape(B, Lp, nh, hdp)[:, :L, :, :hd].reshape(B, L, H)


def _init_params(key, hidden, num_heads, head_size, d_ff):
  """Deterministic PyTorch-style init (U(-1/sqrt(fan_in), 1/sqrt(fan_in)))."""
  dqkv = num_heads * head_size
  keys = jax.random.split(key, 10)

  def lin(kw, kb, fan_in, fan_out):
    bound = 1.0 / math.sqrt(fan_in)
    w = jax.random.uniform(kw, (fan_in, fan_out), jnp.float32, -bound, bound)
    b = jax.random.uniform(kb, (1, fan_out), jnp.float32, -bound, bound)
    return w, b

  wq, bq = lin(keys[0], keys[1], hidden, dqkv)   # nn.Linear(hidden, heads*head_size)
  wk, bk = lin(keys[2], keys[3], hidden, dqkv)
  wv, bv = lin(keys[4], keys[5], hidden, dqkv)
  w1, b1 = lin(keys[6], keys[7], hidden, d_ff)   # Conv1d(hidden, d_ff, 1), stored [in,out]
  w2, b2 = lin(keys[8], keys[9], d_ff, hidden)   # Conv1d(d_ff, hidden, 1), stored [in,out]
  return dict(wq=wq, bq=bq, wk=wk, bk=bk, wv=wv, bv=bv,
              w1=w1, b1=b1, w2=w2, b2=b2)


if __name__ == "__main__":
  B, L = 2, 8
  hidden, attn_heads, head_size = 32, 2, 16
  feed_forward_hidden = 64

  key = jax.random.PRNGKey(0)
  k_x, k_s, k_p = jax.random.split(key, 3)

  x_vto = jax.random.normal(k_x, (B, L, hidden), jnp.float32)
  x_s = jax.random.normal(k_s, (B, hidden), jnp.float32)
  # active_entries: batch 0 fully active, batch 1 has the last 2 steps padded out.
  active_entries = jnp.ones((B, L, 1), jnp.float32)
  active_entries = active_entries.at[1, L - 2:, 0].set(0.0)

  params = _init_params(k_p, hidden, attn_heads, head_size, feed_forward_hidden)

  out = basic_transformer_block(x_vto, x_s, active_entries, params,
                                num_heads=attn_heads, head_size=head_size)
  out = jax.block_until_ready(out)
  assert out.shape == (B, L, hidden) and bool(jnp.all(jnp.isfinite(out)))
  print("KERNEL_OK")
</pallas_src>

<mosaic_0001>
module attributes {stable_mosaic.version = 11 : i64} {
  func.func @_transformer_block_kernel(%arg0: i32, %arg1: memref<8x256xf32, #tpu.memory_space<vmem>>, %arg2: memref<8x1xf32, #tpu.memory_space<vmem>>, %arg3: memref<256x768xbf16, #tpu.memory_space<vmem>>, %arg4: memref<1x768xf32, #tpu.memory_space<vmem>>, %arg5: memref<256x128xbf16, #tpu.memory_space<vmem>>, %arg6: memref<1x128xf32, #tpu.memory_space<vmem>>, %arg7: memref<128x256xbf16, #tpu.memory_space<vmem>>, %arg8: memref<1x256xf32, #tpu.memory_space<vmem>>, %arg9: memref<8x256xf32, #tpu.memory_space<vmem>>) attributes {dimension_semantics = [#tpu.dimension_semantics<parallel>], iteration_bounds = array<i64: 2>, scalar_prefetch = 0 : i64, scratch_operands = 0 : i64, tpu.core_type = #tpu.core_type<tc>, window_params = [{transform_indices = @transform_0, window_bounds = array<i64: 8, 256>}, {transform_indices = @transform_1, window_bounds = array<i64: 8, 1>}, {pipeline_mode = #tpu.pipeline_mode<synchronous>, transform_indices = @transform_2, window_bounds = array<i64: 256, 768>}, {pipeline_mode = #tpu.pipeline_mode<synchronous>, transform_indices = @transform_3, window_bounds = array<i64: 1, 768>}, {pipeline_mode = #tpu.pipeline_mode<synchronous>, transform_indices = @transform_4, window_bounds = array<i64: 256, 128>}, {pipeline_mode = #tpu.pipeline_mode<synchronous>, transform_indices = @transform_5, window_bounds = array<i64: 1, 128>}, {pipeline_mode = #tpu.pipeline_mode<synchronous>, transform_indices = @transform_6, window_bounds = array<i64: 128, 256>}, {pipeline_mode = #tpu.pipeline_mode<synchronous>, transform_indices = @transform_7, window_bounds = array<i64: 1, 256>}, {transform_indices = @transform_8, window_bounds = array<i64: 8, 256>}]} {
    %c0 = arith.constant 0 : index
    %c0_0 = arith.constant 0 : index
    %0 = vector.load %arg1[%c0, %c0_0] : memref<8x256xf32, #tpu.memory_space<vmem>>, vector<8x256xf32>
    %1 = arith.truncf %0 : vector<8x256xf32> to vector<8x256xbf16>
    %c0_1 = arith.constant 0 : index
    %c0_2 = arith.constant 0 : index
    %2 = vector.load %arg3[%c0_1, %c0_2] : memref<256x768xbf16, #tpu.memory_space<vmem>>, vector<256x768xbf16>
    %cst = arith.constant dense<0.000000e+00> : vector<8x768xf32>
    %3 = tpu.matmul %1, %2, %cst {dimension_numbers = #tpu.dot_dimension_numbers<[1], [0], [0], [1], [0, 0, 1, 1], [], []>} : vector<8x256xbf16>, vector<256x768xbf16>, vector<8x768xf32> -> vector<8x768xf32>
    %c0_3 = arith.constant 0 : index
    %c0_4 = arith.constant 0 : index
    %4 = vector.load %arg4[%c0_3, %c0_4] : memref<1x768xf32, #tpu.memory_space<vmem>>, vector<1x768xf32>
    %5 = vector.broadcast %4 : vector<1x768xf32> to vector<8x768xf32>
    %6 = arith.addf %3, %5 : vector<8x768xf32>
    %7 = vector.extract_strided_slice %6 {offsets = [0, 0], sizes = [8, 256], strides = [1, 1]} : vector<8x768xf32> to vector<8x256xf32>
    %8 = arith.truncf %7 : vector<8x256xf32> to vector<8x256xbf16>
    %9 = vector.extract_strided_slice %6 {offsets = [0, 256], sizes = [8, 256], strides = [1, 1]} : vector<8x768xf32> to vector<8x256xf32>
    %10 = arith.truncf %9 : vector<8x256xf32> to vector<8x256xbf16>
    %11 = vector.extract_strided_slice %6 {offsets = [0, 512], sizes = [8, 256], strides = [1, 1]} : vector<8x768xf32> to vector<8x256xf32>
    %12 = arith.truncf %11 : vector<8x256xf32> to vector<8x256xbf16>
    %13 = tpu.iota {dimensions = array<i32: 0>} : vector<8x8xi32>
    %14 = tpu.iota {dimensions = array<i32: 1>} : vector<8x8xi32>
    %15 = arith.cmpi sle, %14, %13 : vector<8x8xi32>
    %c0_5 = arith.constant 0 : index
    %c0_6 = arith.constant 0 : index
    %16 = vector.load %arg2[%c0_5, %c0_6] : memref<8x1xf32, #tpu.memory_space<vmem>>, vector<8x1xf32>
    %17 = tpu.concatenate %16, %16 in 0 : vector<8x1xf32>, vector<8x1xf32> -> vector<16x1xf32>
    %cst_7 = arith.constant 0.000000e+00 : f32
    %18 = vector.broadcast %cst_7 : f32 to vector<16x1xf32>
    %19 = arith.cmpf ogt, %17, %18 : vector<16x1xf32>
    %20 = vector.shape_cast %19 : vector<16x1xi1> to vector<2x8x1xi1>
    %21 = vector.shape_cast %15 : vector<8x8xi1> to vector<1x8x8xi1>
    %22 = vector.broadcast %21 : vector<1x8x8xi1> to vector<2x8x8xi1>
    %23 = vector.broadcast %20 : vector<2x8x1xi1> to vector<2x8x8xi1>
    %24 = arith.andi %22, %23 : vector<2x8x8xi1>
    %25 = vector.extract_strided_slice %8 {offsets = [0, 0], sizes = [8, 128], strides = [1, 1]} : vector<8x256xbf16> to vector<8x128xbf16>
    %26 = vector.shape_cast %25 : vector<8x128xbf16> to vector<1x8x128xbf16>
    %27 = vector.extract_strided_slice %8 {offsets = [0, 128], sizes = [8, 128], strides = [1, 1]} : vector<8x256xbf16> to vector<8x128xbf16>
    %28 = vector.shape_cast %27 : vector<8x128xbf16> to vector<1x8x128xbf16>
    %29 = tpu.concatenate %26, %28 in 0 : vector<1x8x128xbf16>, vector<1x8x128xbf16> -> vector<2x8x128xbf16>
    %30 = vector.extract_strided_slice %10 {offsets = [0, 0], sizes = [8, 128], strides = [1, 1]} : vector<8x256xbf16> to vector<8x128xbf16>
    %31 = vector.shape_cast %30 : vector<8x128xbf16> to vector<1x8x128xbf16>
    %32 = vector.extract_strided_slice %10 {offsets = [0, 128], sizes = [8, 128], strides = [1, 1]} : vector<8x256xbf16> to vector<8x128xbf16>
    %33 = vector.shape_cast %32 : vector<8x128xbf16> to vector<1x8x128xbf16>
    %34 = tpu.concatenate %31, %33 in 0 : vector<1x8x128xbf16>, vector<1x8x128xbf16> -> vector<2x8x128xbf16>
    %35 = vector.extract_strided_slice %12 {offsets = [0, 0], sizes = [8, 128], strides = [1, 1]} : vector<8x256xbf16> to vector<8x128xbf16>
    %36 = vector.shape_cast %35 : vector<8x128xbf16> to vector<1x8x128xbf16>
    %37 = vector.extract_strided_slice %12 {offsets = [0, 128], sizes = [8, 128], strides = [1, 1]} : vector<8x256xbf16> to vector<8x128xbf16>
    %38 = vector.shape_cast %37 : vector<8x128xbf16> to vector<1x8x128xbf16>
    %39 = tpu.concatenate %36, %38 in 0 : vector<1x8x128xbf16>, vector<1x8x128xbf16> -> vector<2x8x128xbf16>
    "tpu.trace_start"() <{level = 10 : i32, message = "bqd,bkd->bqk"}> : () -> ()
    %cst_8 = arith.constant dense<0.000000e+00> : vector<2x8x8xf32>
    %40 = tpu.matmul %29, %34, %cst_8 {dimension_numbers = #tpu.dot_dimension_numbers<[2], [2], [1], [1], [0, 0, 0, 1, 1, 1], [0], [0]>} : vector<2x8x128xbf16>, vector<2x8x128xbf16>, vector<2x8x8xf32> -> vector<2x8x8xf32>
    %cst_9 = arith.constant -1.000000e+09 : f32
    "tpu.trace_stop"() : () -> ()
    %41 = vector.broadcast %cst_9 : f32 to vector<2x8x8xf32>
    %42 = arith.select %24, %40, %41 : vector<2x8x8xi1>, vector<2x8x8xf32>
    %cst_10 = arith.constant dense<0xFF800000> : vector<2x8xf32>
    %43 = vector.multi_reduction <maximumf>, %42, %cst_10 [2] : vector<2x8x8xf32> to vector<2x8xf32>
    %44 = vector.shape_cast %43 : vector<2x8xf32> to vector<2x8x1xf32>
    %45 = vector.broadcast %44 : vector<2x8x1xf32> to vector<2x8x8xf32>
    %46 = arith.subf %42, %45 : vector<2x8x8xf32>
    %47 = math.exp %46 : vector<2x8x8xf32>
    %cst_11 = arith.constant dense<0.000000e+00> : vector<2x8xf32>
    %48 = vector.multi_reduction <add>, %47, %cst_11 [2] : vector<2x8x8xf32> to vector<2x8xf32>
    %49 = vector.shape_cast %48 : vector<2x8xf32> to vector<2x8x1xf32>
    %50 = vector.broadcast %49 : vector<2x8x1xf32> to vector<2x8x8xf32>
    %51 = arith.divf %47, %50 : vector<2x8x8xf32>
    %52 = arith.truncf %51 : vector<2x8x8xf32> to vector<2x8x8xbf16>
    "tpu.trace_start"() <{level = 10 : i32, message = "bqk,bkd->bqd"}> : () -> ()
    %cst_12 = arith.constant dense<0.000000e+00> : vector<2x8x128xf32>
    %53 = tpu.matmul %52, %39, %cst_12 {dimension_numbers = #tpu.dot_dimension_numbers<[2], [1], [1], [2], [0, 0, 0, 1, 1, 2], [0], [0]>} : vector<2x8x8xbf16>, vector<2x8x128xbf16>, vector<2x8x128xf32> -> vector<2x8x128xf32>
    "tpu.trace_stop"() : () -> ()
    %54 = vector.extract_strided_slice %53 {offsets = [0, 0, 0], sizes = [1, 8, 128], strides = [1, 1, 1]} : vector<2x8x128xf32> to vector<1x8x128xf32>
    %55 = vector.shape_cast %54 : vector<1x8x128xf32> to vector<8x128xf32>
    %56 = vector.extract_strided_slice %53 {offsets = [1, 0, 0], sizes = [1, 8, 128], strides = [1, 1, 1]} : vector<2x8x128xf32> to vector<1x8x128xf32>
    %57 = vector.shape_cast %56 : vector<1x8x128xf32> to vector<8x128xf32>
    %58 = tpu.concatenate %55, %57 in 1 : vector<8x128xf32>, vector<8x128xf32> -> vector<8x256xf32>
    %59 = arith.addf %0, %58 : vector<8x256xf32>
    %60 = arith.truncf %59 : vector<8x256xf32> to vector<8x256xbf16>
    %c0_13 = arith.constant 0 : index
    %c0_14 = arith.constant 0 : index
    %61 = vector.load %arg5[%c0_13, %c0_14] : memref<256x128xbf16, #tpu.memory_space<vmem>>, vector<256x128xbf16>
    %cst_15 = arith.constant dense<0.000000e+00> : vector<8x128xf32>
    %62 = tpu.matmul %60, %61, %cst_15 {dimension_numbers = #tpu.dot_dimension_numbers<[1], [0], [0], [1], [0, 0, 1, 1], [], []>} : vector<8x256xbf16>, vector<256x128xbf16>, vector<8x128xf32> -> vector<8x128xf32>
    %c0_16 = arith.constant 0 : index
    %c0_17 = arith.constant 0 : index
    %63 = vector.load %arg6[%c0_16, %c0_17] : memref<1x128xf32, #tpu.memory_space<vmem>>, vector<1x128xf32>
    %64 = vector.broadcast %63 : vector<1x128xf32> to vector<8x128xf32>
    %65 = arith.addf %62, %64 : vector<8x128xf32>
    %cst_18 = arith.constant 0.000000e+00 : f32
    %66 = vector.broadcast %cst_18 : f32 to vector<8x128xf32>
    %67 = arith.maximumf %65, %66 : vector<8x128xf32>
    %68 = arith.truncf %67 : vector<8x128xf32> to vector<8x128xbf16>
    %c0_19 = arith.constant 0 : index
    %c0_20 = arith.constant 0 : index
    %69 = vector.load %arg7[%c0_19, %c0_20] : memref<128x256xbf16, #tpu.memory_space<vmem>>, vector<128x256xbf16>
    %cst_21 = arith.constant dense<0.000000e+00> : vector<8x256xf32>
    %70 = tpu.matmul %68, %69, %cst_21 {dimension_numbers = #tpu.dot_dimension_numbers<[1], [0], [0], [1], [0, 0, 1, 1], [], []>} : vector<8x128xbf16>, vector<128x256xbf16>, vector<8x256xf32> -> vector<8x256xf32>
    %c0_22 = arith.constant 0 : index
    %c0_23 = arith.constant 0 : index
    %71 = vector.load %arg8[%c0_22, %c0_23] : memref<1x256xf32, #tpu.memory_space<vmem>>, vector<1x256xf32>
    %72 = vector.broadcast %71 : vector<1x256xf32> to vector<8x256xf32>
    %73 = arith.addf %70, %72 : vector<8x256xf32>
    %74 = arith.addf %59, %73 : vector<8x256xf32>
    %c0_24 = arith.constant 0 : index
    %c0_25 = arith.constant 0 : index
    %75 = vector.load %arg9[%c0_24, %c0_25] : memref<8x256xf32, #tpu.memory_space<vmem>>, vector<8x256xf32>
    tpu.vector_store %arg9[%c0_24, %c0_25], %74 {strides = array<i32>} : memref<8x256xf32, #tpu.memory_space<vmem>>, vector<8x256xf32>,
    return
  }
  func.func @transform_0(%arg0: i32) -> (i32, i32) {
    %c0_i32 = arith.constant 0 : i32
    %c0_i32_0 = arith.constant 0 : i32
    return %arg0, %c0_i32 : i32, i32
  }
  func.func @transform_1(%arg0: i32) -> (i32, i32) {
    %c0_i32 = arith.constant 0 : i32
    %c0_i32_0 = arith.constant 0 : i32
    return %arg0, %c0_i32 : i32, i32
  }
  func.func @transform_2(%arg0: i32) -> (i32, i32) {
    %c0_i32 = arith.constant 0 : i32
    %c0_i32_0 = arith.constant 0 : i32
    %c0_i32_1 = arith.constant 0 : i32
    return %c0_i32, %c0_i32_0 : i32, i32
  }
  func.func @transform_3(%arg0: i32) -> (i32, i32) {
    %c0_i32 = arith.constant 0 : i32
    %c0_i32_0 = arith.constant 0 : i32
    %c0_i32_1 = arith.constant 0 : i32
    return %c0_i32, %c0_i32_0 : i32, i32
  }
  func.func @transform_4(%arg0: i32) -> (i32, i32) {
    %c0_i32 = arith.constant 0 : i32
    %c0_i32_0 = arith.constant 0 : i32
    %c0_i32_1 = arith.constant 0 : i32
    return %c0_i32, %c0_i32_0 : i32, i32
  }
  func.func @transform_5(%arg0: i32) -> (i32, i32) {
    %c0_i32 = arith.constant 0 : i32
    %c0_i32_0 = arith.constant 0 : i32
    %c0_i32_1 = arith.constant 0 : i32
    return %c0_i32, %c0_i32_0 : i32, i32
  }
  func.func @transform_6(%arg0: i32) -> (i32, i32) {
    %c0_i32 = arith.constant 0 : i32
    %c0_i32_0 = arith.constant 0 : i32
    %c0_i32_1 = arith.constant 0 : i32
    return %c0_i32, %c0_i32_0 : i32, i32
  }
  func.func @transform_7(%arg0: i32) -> (i32, i32) {
    %c0_i32 = arith.constant 0 : i32
    %c0_i32_0 = arith.constant 0 : i32
    %c0_i32_1 = arith.constant 0 : i32
    return %c0_i32, %c0_i32_0 : i32, i32
  }
  func.func @transform_8(%arg0: i32) -> (i32, i32) {
    %c0_i32 = arith.constant 0 : i32
    %c0_i32_0 = arith.constant 0 : i32
    return %arg0, %c0_i32 : i32, i32
  }
}

</mosaic_0001>

<llo_original>
// kernel: tpu_custom_call.1
$region0: #{tpu_custom_call.1}
  #allocation0 [shape = 'u32[]', space=smem, size = 0x4, offset = 0x4, fixed_abs, tag = 'smem constant byte address 0x4 - core index']
  #allocation1 [shape = 'u32[144,128]{1,0:T(1,128)}', space=vmem, size = 0x12000, scoped, tag = 'internal scratch']
  %s0 = inlined_call_operand.hbm [shape: f32[16,256], index: 0, kind: input, shape index: {}]
  %s1 = inlined_call_operand.vmem [shape: f32[16,1], index: 1, kind: input, shape index: {}]
  %s2 = inlined_call_operand.hbm [shape: bf16[256,768], index: 2, kind: input, shape index: {}]
  %s3 = inlined_call_operand.vmem [shape: f32[1,768], index: 3, kind: input, shape index: {}]
  %s4 = inlined_call_operand.hbm [shape: bf16[256,128], index: 4, kind: input, shape index: {}]
  %s5 = inlined_call_operand.vmem [shape: f32[1,128], index: 5, kind: input, shape index: {}]
  %s6 = inlined_call_operand.hbm [shape: bf16[128,256], index: 6, kind: input, shape index: {}]
  %s7 = inlined_call_operand.vmem [shape: f32[1,256], index: 7, kind: input, shape index: {}]
  %s8 = inlined_call_operand.hbm [shape: f32[16,256], index: 8, kind: output, shape index: {}]
  %s9 = sld [smem:[#allocation0]]
  $region81: #{tpu_custom_call.1} parent=0
    _
  %s11 = ssub.s32 1, %s9
  %s12 = scalar_select 0, %s11, %s9
  $region1: #{tpu_custom_call.1} parent=0
    #allocation2 [shape = 'u8[16384]{0}', space=vmem, size = 0x4000, scoped, tag = 'input window, operand 0']
    #allocation3 [shape = 's32[2]{0}', space=sflag, size = 0x8, scoped, tag = 'scoped memory for tpu_custom_call.1']
    #allocation4 [shape = 's32[2]{0}', space=sflag, size = 0x8, scoped, tag = 'scoped memory for tpu_custom_call.1']
    #allocation5 [shape = 'u8[393216]{0}', space=vmem, size = 0x60000, scoped, tag = 'input window, operand 2, single buffered']
    #allocation6 [shape = 's32[1]{0}', space=sflag, size = 0x4, scoped, tag = 'scoped memory for tpu_custom_call.1']
    #allocation7 [shape = 'u8[65536]{0}', space=vmem, size = 0x10000, scoped, tag = 'input window, operand 4, single buffered']
    #allocation8 [shape = 'u8[65536]{0}', space=vmem, size = 0x10000, scoped, tag = 'input window, operand 6, single buffered']
    #allocation9 [shape = 's32[1]{0}', space=sflag, size = 0x4, scoped, tag = 'scoped memory for tpu_custom_call.1']
    #allocation10 [shape = 'u8[16384]{0}', space=vmem, size = 0x4000, scoped, tag = 'output window, operand 0']
    %13 = vsyncpa [#allocation3], 0
    %s14 = scalar_lea.sflag [#allocation3], 1
    %15 = vsyncpa %s14, 0
    %16 = vsyncpa [#allocation6], 0
    %17 = vsyncpa [#allocation9], 0
    %18 = vsyncpa [#allocation4], 0
    %s19 = scalar_lea.sflag [#allocation4], 1
    %20 = vsyncpa %s19, 0
    loop: start=0, step=1, limit=4
    $region2: #{tpu_custom_call.1} parent=1 // loop_pre_header
      _
    $region3: #{tpu_custom_call.1} parent=1 // loop_header
      %s22 = sphi 0, %s26
      %p23 = scmp.ge.s32.totalorder %s22, 4
      %s32 = sphi 0, %s34
      %s35 = sphi 0, %s32
      %s36 = sphi 0, %s35
      %s52 = sphi 0, %s36
      %s58 = sphi 0, %s60
      %s61 = sphi 0, %s58
      %s62 = sphi 0, %s61
      %s78 = sphi 0, %s62
      %s82 = sphi 0, %s82
      %s84 = sphi 0, %s82
      %s85 = sphi 0, %s84
      %s99 = sphi 0, %s85
      %s103 = sphi 0, %s103
      %s105 = sphi 0, %s103
      %s106 = sphi 0, %s105
      %s120 = sphi 0, %s106
      %s124 = sphi 0, %s124
      %s126 = sphi 0, %s124
      %s127 = sphi 0, %s126
      %s141 = sphi 0, %s127
      %s145 = sphi 0, %s145
      %s147 = sphi 0, %s145
      %s148 = sphi 0, %s147
      %s162 = sphi 0, %s148
      %s166 = sphi 0, %s166
      %s168 = sphi 0, %s166
      %s169 = sphi 0, %s168
      %s183 = sphi 0, %s169
      %s187 = sphi 0, %s187
      %s189 = sphi 0, %s187
      %s190 = sphi 0, %s189
      %s204 = sphi 0, %s190
      %s210 = sphi 0, %s212
      %s213 = sphi 0, %s210
      %s214 = sphi 0, %s213
      %s230 = sphi 0, %s214
    $region4: #{tpu_custom_call.1} parent=1 // loop_header_branch
      %25 = sbr.rel (%p23) target = $region8
    $region5: #{tpu_custom_call.1} parent=1 // loop_body
      %s27 = ssub.s32 %s22, 1
      %s28 = ssub.s32 %s22, 2
      %s29 = sadd.s32 %s22, 1
      %s30 = ssub.s32 %s22, %s29
      %p31 = scmp.eq.s32.totalorder %s30, 0
      %s33 = sadd.s32 %s32, 1
      %s34 = scalar_select %p31, %s32, %s33
      %p37 = pneg %p31
      %p38 = scmp.eq.s32.totalorder %s22, 1
      %p39 = por %p37, %p38
      %p40 = scmp.ne.s32.totalorder %s32, %s35
      %p41 = scmp.eq.s32.totalorder %s22, 0
      %p42 = por %p40, %p41
      %p43 = scmp.ne.s32.totalorder %s32, %s35
      %p44 = scmp.eq.s32.totalorder %s27, 1
      %p45 = por %p43, %p44
      %p46 = scmp.ne.s32.totalorder %s35, %s36
      %p47 = scmp.eq.s32.totalorder %s27, 0
      %p48 = por %p46, %p47
      %p49 = scmp.ne.s32.totalorder %s35, %s36
      %p50 = scmp.eq.s32.totalorder %s28, 1
      %p51 = por %p49, %p50
      %p53 = scmp.ne.s32.totalorder %s36, %s52
      %p54 = scmp.eq.s32.totalorder %s28, 0
      %p55 = por %p53, %p54
      %s56 = ssub.s32 %s22, %s29
      %p57 = scmp.eq.s32.totalorder %s56, 0
      %s59 = sadd.s32 %s58, 1
      %s60 = scalar_select %p57, %s58, %s59
      %p63 = pneg %p57
      %p64 = scmp.eq.s32.totalorder %s22, 1
      %p65 = por %p63, %p64
      %p66 = scmp.ne.s32.totalorder %s58, %s61
      %p67 = scmp.eq.s32.totalorder %s22, 0
      %p68 = por %p66, %p67
      %p69 = scmp.ne.s32.totalorder %s58, %s61
      %p70 = scmp.eq.s32.totalorder %s27, 1
      %p71 = por %p69, %p70
      %p72 = scmp.ne.s32.totalorder %s61, %s62
      %p73 = scmp.eq.s32.totalorder %s27, 0
      %p74 = por %p72, %p73
      %p75 = scmp.ne.s32.totalorder %s61, %s62
      %p76 = scmp.eq.s32.totalorder %s28, 1
      %p77 = por %p75, %p76
      %p79 = scmp.ne.s32.totalorder %s62, %s78
      %p80 = scmp.eq.s32.totalorder %s28, 0
      %p81 = por %p79, %p80
      %s83 = sadd.s32 %s82, 1
      %p86 = scmp.eq.s32.totalorder %s22, 1
      %p87 = scmp.ne.s32.totalorder %s82, %s84
      %p88 = scmp.eq.s32.totalorder %s22, 0
      %p89 = por %p87, %p88
      %p90 = scmp.ne.s32.totalorder %s82, %s84
      %p91 = scmp.eq.s32.totalorder %s27, 1
      %p92 = por %p90, %p91
      %p93 = scmp.ne.s32.totalorder %s84, %s85
      %p94 = scmp.eq.s32.totalorder %s27, 0
      %p95 = por %p93, %p94
      %p96 = scmp.ne.s32.totalorder %s84, %s85
      %p97 = scmp.eq.s32.totalorder %s28, 1
      %p98 = por %p96, %p97
      %p100 = scmp.ne.s32.totalorder %s85, %s99
      %p101 = scmp.eq.s32.totalorder %s28, 0
      %p102 = por %p100, %p101
      %s104 = sadd.s32 %s103, 1
      %p107 = scmp.eq.s32.totalorder %s22, 1
      %p108 = scmp.ne.s32.totalorder %s103, %s105
      %p109 = scmp.eq.s32.totalorder %s22, 0
      %p110 = por %p108, %p109
      %p111 = scmp.ne.s32.totalorder %s103, %s105
      %p112 = scmp.eq.s32.totalorder %s27, 1
      %p113 = por %p111, %p112
      %p114 = scmp.ne.s32.totalorder %s105, %s106
      %p115 = scmp.eq.s32.totalorder %s27, 0
      %p116 = por %p114, %p115
      %p117 = scmp.ne.s32.totalorder %s105, %s106
      %p118 = scmp.eq.s32.totalorder %s28, 1
      %p119 = por %p117, %p118
      %p121 = scmp.ne.s32.totalorder %s106, %s120
      %p122 = scmp.eq.s32.totalorder %s28, 0
      %p123 = por %p121, %p122
      %s125 = sadd.s32 %s124, 1
      %p128 = scmp.eq.s32.totalorder %s22, 1
      %p129 = scmp.ne.s32.totalorder %s124, %s126
      %p130 = scmp.eq.s32.totalorder %s22, 0
      %p131 = por %p129, %p130
      %p132 = scmp.ne.s32.totalorder %s124, %s126
      %p133 = scmp.eq.s32.totalorder %s27, 1
      %p134 = por %p132, %p133
      %p135 = scmp.ne.s32.totalorder %s126, %s127
      %p136 = scmp.eq.s32.totalorder %s27, 0
      %p137 = por %p135, %p136
      %p138 = scmp.ne.s32.totalorder %s126, %s127
      %p139 = scmp.eq.s32.totalorder %s28, 1
      %p140 = por %p138, %p139
      %p142 = scmp.ne.s32.totalorder %s127, %s141
      %p143 = scmp.eq.s32.totalorder %s28, 0
      %p144 = por %p142, %p143
      %s146 = sadd.s32 %s145, 1
      %p149 = scmp.eq.s32.totalorder %s22, 1
      %p150 = scmp.ne.s32.totalorder %s145, %s147
      %p151 = scmp.eq.s32.totalorder %s22, 0
      %p152 = por %p150, %p151
      %p153 = scmp.ne.s32.totalorder %s145, %s147
      %p154 = scmp.eq.s32.totalorder %s27, 1
      %p155 = por %p153, %p154
      %p156 = scmp.ne.s32.totalorder %s147, %s148
      %p157 = scmp.eq.s32.totalorder %s27, 0
      %p158 = por %p156, %p157
      %p159 = scmp.ne.s32.totalorder %s147, %s148
      %p160 = scmp.eq.s32.totalorder %s28, 1
      %p161 = por %p159, %p160
      %p163 = scmp.ne.s32.totalorder %s148, %s162
      %p164 = scmp.eq.s32.totalorder %s28, 0
      %p165 = por %p163, %p164
      %s167 = sadd.s32 %s166, 1
      %p170 = scmp.eq.s32.totalorder %s22, 1
      %p171 = scmp.ne.s32.totalorder %s166, %s168
      %p172 = scmp.eq.s32.totalorder %s22, 0
      %p173 = por %p171, %p172
      %p174 = scmp.ne.s32.totalorder %s166, %s168
      %p175 = scmp.eq.s32.totalorder %s27, 1
      %p176 = por %p174, %p175
      %p177 = scmp.ne.s32.totalorder %s168, %s169
      %p178 = scmp.eq.s32.totalorder %s27, 0
      %p179 = por %p177, %p178
      %p180 = scmp.ne.s32.totalorder %s168, %s169
      %p181 = scmp.eq.s32.totalorder %s28, 1
      %p182 = por %p180, %p181
      %p184 = scmp.ne.s32.totalorder %s169, %s183
      %p185 = scmp.eq.s32.totalorder %s28, 0
      %p186 = por %p184, %p185
      %s188 = sadd.s32 %s187, 1
      %p191 = scmp.eq.s32.totalorder %s22, 1
      %p192 = scmp.ne.s32.totalorder %s187, %s189
      %p193 = scmp.eq.s32.totalorder %s22, 0
      %p194 = por %p192, %p193
      %p195 = scmp.ne.s32.totalorder %s187, %s189
      %p196 = scmp.eq.s32.totalorder %s27, 1
      %p197 = por %p195, %p196
      %p198 = scmp.ne.s32.totalorder %s189, %s190
      %p199 = scmp.eq.s32.totalorder %s27, 0
      %p200 = por %p198, %p199
      %p201 = scmp.ne.s32.totalorder %s189, %s190
      %p202 = scmp.eq.s32.totalorder %s28, 1
      %p203 = por %p201, %p202
      %p205 = scmp.ne.s32.totalorder %s190, %s204
      %p206 = scmp.eq.s32.totalorder %s28, 0
      %p207 = por %p205, %p206
      %s208 = ssub.s32 %s22, %s29
      %p209 = scmp.eq.s32.totalorder %s208, 0
      %s211 = sadd.s32 %s210, 1
      %s212 = scalar_select %p209, %s210, %s211
      %p215 = pneg %p209
      %p216 = scmp.eq.s32.totalorder %s22, 1
      %p217 = por %p215, %p216
      %p218 = scmp.ne.s32.totalorder %s210, %s213
      %p219 = scmp.eq.s32.totalorder %s22, 0
      %p220 = por %p218, %p219
      %p221 = scmp.ne.s32.totalorder %s210, %s213
      %p222 = scmp.eq.s32.totalorder %s27, 1
      %p223 = por %p221, %p222
      %p224 = scmp.ne.s32.totalorder %s213, %s214
      %p225 = scmp.eq.s32.totalorder %s27, 0
      %p226 = por %p224, %p225
      %p227 = scmp.ne.s32.totalorder %s213, %s214
      %p228 = scmp.eq.s32.totalorder %s28, 1
      %p229 = por %p227, %p228
      %p231 = scmp.ne.s32.totalorder %s214, %s230
      %p232 = scmp.eq.s32.totalorder %s28, 0
      %p233 = por %p231, %p232
      %p234 = scmp.le.s32.totalorder 1, %s22
      %p235 = scmp.lt.s32.totalorder %s22, 3
      %p236 = pnand %p234, %p235
      %p237 = pneg %p236
      // Predicated region
      $region9: #{tpu_custom_call.1} parent=5 // pred_check
        _
      $region10: #{tpu_custom_call.1} parent=5 // pred_check_branch
        %239 = sbr.rel (%p236) target = $region12
      $region11: #{tpu_custom_call.1} parent=5 // pred_region
        %s240 = ssub.s32 %s22, 1
        // Predicated region
        $region13: #{tpu_custom_call.1} parent=11 // pred_check
          %p241 = pneg %p95
        $region14: #{tpu_custom_call.1} parent=11 // pred_check_branch
          %243 = sbr.rel (%p241) target = $region16
        $region15: #{tpu_custom_call.1} parent=11 // pred_region
          %s245 = ssub.s32 12288, 12288
          %246 = vsyncadd [#allocation6], %s245
          %s247 = sshll.u32 [#allocation5], 4
          %s248 = int_to_ptr.vmem [resolvable:$true] %s247
          %253 = dma.hbm_to_vmem [thread:$0]  %s2, 12288, %s248, [#allocation6], 384, 384, 24
        $region16: #{tpu_custom_call.1} parent=11 // pred_fallthru
          _
        // Predicated region
        $region17: #{tpu_custom_call.1} parent=11 // pred_check
          %p254 = pneg %p116
        $region18: #{tpu_custom_call.1} parent=11 // pred_check_branch
          %256 = sbr.rel (%p254) target = $region20
        $region19: #{tpu_custom_call.1} parent=11 // pred_region
          _
        $region20: #{tpu_custom_call.1} parent=11 // pred_fallthru
          _
        // Predicated region
        $region21: #{tpu_custom_call.1} parent=11 // pred_check
          %p257 = pneg %p137
        $region22: #{tpu_custom_call.1} parent=11 // pred_check_branch
          %259 = sbr.rel (%p257) target = $region24
        $region23: #{tpu_custom_call.1} parent=11 // pred_region
          %s261 = ssub.s32 2048, 2048
          %262 = vsyncadd [#allocation6], %s261
          %s263 = sshll.u32 [#allocation7], 4
          %s264 = int_to_ptr.vmem [resolvable:$true] %s263
          %269 = dma.hbm_to_vmem [thread:$0]  %s4, 2048, %s264, [#allocation6], 64, 64, 4
        $region24: #{tpu_custom_call.1} parent=11 // pred_fallthru
          _
        // Predicated region
        $region25: #{tpu_custom_call.1} parent=11 // pred_check
          %p270 = pneg %p158
        $region26: #{tpu_custom_call.1} parent=11 // pred_check_branch
          %272 = sbr.rel (%p270) target = $region28
        $region27: #{tpu_custom_call.1} parent=11 // pred_region
          _
        $region28: #{tpu_custom_call.1} parent=11 // pred_fallthru
          _
        // Predicated region
        $region29: #{tpu_custom_call.1} parent=11 // pred_check
          %p273 = pneg %p179
        $region30: #{tpu_custom_call.1} parent=11 // pred_check_branch
          %275 = sbr.rel (%p273) target = $region32
        $region31: #{tpu_custom_call.1} parent=11 // pred_region
          %s277 = ssub.s32 2048, 2048
          %278 = vsyncadd [#allocation9], %s277
          %s279 = sshll.u32 [#allocation8], 4
          %s280 = int_to_ptr.vmem [resolvable:$true] %s279
          %285 = dma.hbm_to_vmem [thread:$0]  %s6, 2048, %s280, [#allocation9], 128, 128, 8
        $region32: #{tpu_custom_call.1} parent=11 // pred_fallthru
          _
        // Predicated region
        $region33: #{tpu_custom_call.1} parent=11 // pred_check
          %p286 = pneg %p200
        $region34: #{tpu_custom_call.1} parent=11 // pred_check_branch
          %288 = sbr.rel (%p286) target = $region36
        $region35: #{tpu_custom_call.1} parent=11 // pred_region
          _
        $region36: #{tpu_custom_call.1} parent=11 // pred_fallthru
          _
      $region12: #{tpu_custom_call.1} parent=5 // pred_fallthru
        _
      %p289 = scmp.lt.s32.totalorder %s22, 2
      // Predicated region
      $region37: #{tpu_custom_call.1} parent=5 // pred_check
        %p290 = pneg %p289
      $region38: #{tpu_custom_call.1} parent=5 // pred_check_branch
        %292 = sbr.rel (%p290) target = $region40
      $region39: #{tpu_custom_call.1} parent=5 // pred_region
        // Predicated region
        $region41: #{tpu_custom_call.1} parent=39 // pred_check
          %p293 = pneg %p42
        $region42: #{tpu_custom_call.1} parent=39 // pred_check_branch
          %295 = sbr.rel (%p293) target = $region44
        $region43: #{tpu_custom_call.1} parent=39 // pred_region
          %s296 = sand.u32 %s32, 1
          %s297 = scalar_lea.sflag [#allocation3], %s296
          %s298 = sand.u32 %s32, 1
          %s299 = smul.addr %s298, 16
          %s300 = scalar_lea.vmem [#allocation2], %s299
          %s302 = ssub.s32 256, 256
          %303 = vsyncadd %s297, %s302
          %s304 = smul.addr %s22, 2
          %s305 = smul.addr %s304, 128
          %s306 = scalar_lea.hbm %s0, %s305
          %s308 = sshll.u32 %s300, 4
          %s309 = int_to_ptr.vmem [resolvable:$true] %s308
          %311 = dma.hbm_to_vmem [thread:$0]  %s306, 256, %s309, %s297
        $region44: #{tpu_custom_call.1} parent=39 // pred_fallthru
          _
        // Predicated region
        $region45: #{tpu_custom_call.1} parent=39 // pred_check
          %p312 = pneg %p68
        $region46: #{tpu_custom_call.1} parent=39 // pred_check_branch
          %314 = sbr.rel (%p312) target = $region48
        $region47: #{tpu_custom_call.1} parent=39 // pred_region
          %p315 = scmp.lt.s32.totalorder %s22, 1
          %s316 = scalar_select %p315, %s22, 1
          %s317 = smul.addr %s316, 8
          %s318 = scalar_lea.vmem %s1, %s317
        $region48: #{tpu_custom_call.1} parent=39 // pred_fallthru
          _
      $region40: #{tpu_custom_call.1} parent=5 // pred_fallthru
        _
      %p319 = scmp.le.s32.totalorder 1, %s22
      %p320 = scmp.lt.s32.totalorder %s22, 3
      %p321 = pnand %p319, %p320
      %p322 = pneg %p321
      // Predicated region
      $region49: #{tpu_custom_call.1} parent=5 // pred_check
        _
      $region50: #{tpu_custom_call.1} parent=5 // pred_check_branch
        %324 = sbr.rel (%p321) target = $region52
      $region51: #{tpu_custom_call.1} parent=5 // pred_region
        %s325 = ssub.s32 %s22, 1
        %s326 = sand.u32 %s35, 1
        %s327 = scalar_lea.sflag [#allocation3], %s326
        %s328 = sand.u32 %s35, 1
        %s329 = smul.addr %s328, 16
        %s330 = scalar_lea.vmem [#allocation2], %s329
        // Predicated region
        $region53: #{tpu_custom_call.1} parent=51 // pred_check
          %p331 = pneg %p48
        $region54: #{tpu_custom_call.1} parent=51 // pred_check_branch
          %333 = sbr.rel (%p331) target = $region56
        $region55: #{tpu_custom_call.1} parent=51 // pred_region
          %334 = dma.done %s327, 256
        $region56: #{tpu_custom_call.1} parent=51 // pred_fallthru
          _
        // Predicated region
        $region57: #{tpu_custom_call.1} parent=51 // pred_check
          %p335 = pneg %p95
        $region58: #{tpu_custom_call.1} parent=51 // pred_check_branch
          %337 = sbr.rel (%p335) target = $region60
        $region59: #{tpu_custom_call.1} parent=51 // pred_region
          %338 = dma.done [#allocation6], 12288
        $region60: #{tpu_custom_call.1} parent=51 // pred_fallthru
          _
        // Predicated region
        $region61: #{tpu_custom_call.1} parent=51 // pred_check
          %p339 = pneg %p137
        $region62: #{tpu_custom_call.1} parent=51 // pred_check_branch
          %341 = sbr.rel (%p339) target = $region64
        $region63: #{tpu_custom_call.1} parent=51 // pred_region
          %342 = dma.done [#allocation6], 2048
        $region64: #{tpu_custom_call.1} parent=51 // pred_fallthru
          _
        // Predicated region
        $region65: #{tpu_custom_call.1} parent=51 // pred_check
          %p343 = pneg %p179
        $region66: #{tpu_custom_call.1} parent=51 // pred_check_branch
          %345 = sbr.rel (%p343) target = $region68
        $region67: #{tpu_custom_call.1} parent=51 // pred_region
          %346 = dma.done [#allocation9], 2048
        $region68: #{tpu_custom_call.1} parent=51 // pred_fallthru
          _
        %s347 = sand.u32 %s35, 1
        %s348 = scalar_lea.sflag [#allocation3], %s347
        %s349 = sand.u32 %s35, 1
        %s350 = smul.addr %s349, 16
        %s351 = scalar_lea.vmem [#allocation2], %s350
        %p352 = pneg %p48
        %p353 = pneg %p45
        %p354 = scmp.lt.s32.totalorder %s27, 1
        %s355 = scalar_select %p354, %s27, 1
        %s356 = smul.addr %s355, 8
        %s357 = scalar_lea.vmem %s1, %s356
        %p358 = pneg %p74
        %p359 = pneg %p71
        %p360 = pneg %p95
        %p361 = pneg %p92
        %p362 = pneg %p116
        %p363 = pneg %p113
        %p364 = pneg %p137
        %p365 = pneg %p134
        %p366 = pneg %p158
        %p367 = pneg %p155
        %p368 = pneg %p179
        %p369 = pneg %p176
        %p370 = pneg %p200
        %p371 = pneg %p197
        %p372 = pneg %p226
        %p373 = pneg %p223
        %s374 = sand.u32 %s213, 1
        %s375 = scalar_lea.sflag [#allocation4], %s374
        %s376 = sand.u32 %s213, 1
        %s377 = smul.addr %s376, 16
        %s378 = scalar_lea.vmem [#allocation10], %s377
        %p379 = scmp.lt.s32.totalorder %s27, 1
        %s380 = scalar_select %p379, %s27, 1
        %s381 = smul.addr %s380, 8
        %s382 = scalar_lea.vmem %s1, %s381
        %v384 = vld [vmem:[%s330] sm:$0xff]
        %v385 = vld [vmem:[%s330 + $0x8] sm:$0xff]
        %v386 = vpack.c.bf16 %v384, %v384
        %v387 = vpack.c.bf16 %v385, %v385
        %v388 = vld [vmem:[#allocation5] sm:$0xff]
        %v389 = vld [vmem:[#allocation5 + $0x8] sm:$0xff]
        %v390 = vld [vmem:[#allocation5 + $0x10] sm:$0xff]
        %v391 = vld [vmem:[#allocation5 + $0x18] sm:$0xff]
        %v392 = vld [vmem:[#allocation5 + $0x20] sm:$0xff]
        %v393 = vld [vmem:[#allocation5 + $0x28] sm:$0xff]
        %v394 = vld [vmem:[#allocation5 + $0x30] sm:$0xff]
        %v395 = vld [vmem:[#allocation5 + $0x38] sm:$0xff]
        %v396 = vld [vmem:[#allocation5 + $0x40] sm:$0xff]
        %v397 = vld [vmem:[#allocation5 + $0x48] sm:$0xff]
        %v398 = vld [vmem:[#allocation5 + $0x50] sm:$0xff]
        %v399 = vld [vmem:[#allocation5 + $0x58] sm:$0xff]
        %v400 = vld [vmem:[#allocation5 + $0x60] sm:$0xff]
        %v401 = vld [vmem:[#allocation5 + $0x68] sm:$0xff]
        %v402 = vld [vmem:[#allocation5 + $0x70] sm:$0xff]
        %v403 = vld [vmem:[#allocation5 + $0x78] sm:$0xff]
        %v404 = vld [vmem:[#allocation5 + $0x80] sm:$0xff]
        %v405 = vld [vmem:[#allocation5 + $0x88] sm:$0xff]
        %v406 = vld [vmem:[#allocation5 + $0x90] sm:$0xff]
        %v407 = vld [vmem:[#allocation5 + $0x98] sm:$0xff]
        %v408 = vld [vmem:[#allocation5 + $0xa0] sm:$0xff]
        %v409 = vld [vmem:[#allocation5 + $0xa8] sm:$0xff]
        %v410 = vld [vmem:[#allocation5 + $0xb0] sm:$0xff]
        %v411 = vld [vmem:[#allocation5 + $0xb8] sm:$0xff]
        %v412 = vld [vmem:[#allocation5 + $0xc0] sm:$0xff]
        %v413 = vld [vmem:[#allocation5 + $0xc8] sm:$0xff]
        %v414 = vld [vmem:[#allocation5 + $0xd0] sm:$0xff]
        %v415 = vld [vmem:[#allocation5 + $0xd8] sm:$0xff]
        %v416 = vld [vmem:[#allocation5 + $0xe0] sm:$0xff]
        %v417 = vld [vmem:[#allocation5 + $0xe8] sm:$0xff]
        %v418 = vld [vmem:[#allocation5 + $0xf0] sm:$0xff]
        %v419 = vld [vmem:[#allocation5 + $0xf8] sm:$0xff]
        %v420 = vld [vmem:[#allocation5 + $0x100] sm:$0xff]
        %v421 = vld [vmem:[#allocation5 + $0x108] sm:$0xff]
        %v422 = vld [vmem:[#allocation5 + $0x110] sm:$0xff]
        %v423 = vld [vmem:[#allocation5 + $0x118] sm:$0xff]
        %v424 = vld [vmem:[#allocation5 + $0x120] sm:$0xff]
        %v425 = vld [vmem:[#allocation5 + $0x128] sm:$0xff]
        %v426 = vld [vmem:[#allocation5 + $0x130] sm:$0xff]
        %v427 = vld [vmem:[#allocation5 + $0x138] sm:$0xff]
        %v428 = vld [vmem:[#allocation5 + $0x140] sm:$0xff]
        %v429 = vld [vmem:[#allocation5 + $0x148] sm:$0xff]
        %v430 = vld [vmem:[#allocation5 + $0x150] sm:$0xff]
        %v431 = vld [vmem:[#allocation5 + $0x158] sm:$0xff]
        %v432 = vld [vmem:[#allocation5 + $0x160] sm:$0xff]
        %v433 = vld [vmem:[#allocation5 + $0x168] sm:$0xff]
        %v434 = vld [vmem:[#allocation5 + $0x170] sm:$0xff]
        %v435 = vld [vmem:[#allocation5 + $0x178] sm:$0xff]
        %v436 = vld [vmem:[#allocation5 + $0x180] sm:$0xff]
        %v437 = vld [vmem:[#allocation5 + $0x188] sm:$0xff]
        %v438 = vld [vmem:[#allocation5 + $0x190] sm:$0xff]
        %v439 = vld [vmem:[#allocation5 + $0x198] sm:$0xff]
        %v440 = vld [vmem:[#allocation5 + $0x1a0] sm:$0xff]
        %v441 = vld [vmem:[#allocation5 + $0x1a8] sm:$0xff]
        %v442 = vld [vmem:[#allocation5 + $0x1b0] sm:$0xff]
        %v443 = vld [vmem:[#allocation5 + $0x1b8] sm:$0xff]
        %v444 = vld [vmem:[#allocation5 + $0x1c0] sm:$0xff]
        %v445 = vld [vmem:[#allocation5 + $0x1c8] sm:$0xff]
        %v446 = vld [vmem:[#allocation5 + $0x1d0] sm:$0xff]
        %v447 = vld [vmem:[#allocation5 + $0x1d8] sm:$0xff]
        %v448 = vld [vmem:[#allocation5 + $0x1e0] sm:$0xff]
        %v449 = vld [vmem:[#allocation5 + $0x1e8] sm:$0xff]
        %v450 = vld [vmem:[#allocation5 + $0x1f0] sm:$0xff]
        %v451 = vld [vmem:[#allocation5 + $0x1f8] sm:$0xff]
        %v452 = vld [vmem:[#allocation5 + $0x200] sm:$0xff]
        %v453 = vld [vmem:[#allocation5 + $0x208] sm:$0xff]
        %v454 = vld [vmem:[#allocation5 + $0x210] sm:$0xff]
        %v455 = vld [vmem:[#allocation5 + $0x218] sm:$0xff]
        %v456 = vld [vmem:[#allocation5 + $0x220] sm:$0xff]
        %v457 = vld [vmem:[#allocation5 + $0x228] sm:$0xff]
        %v458 = vld [vmem:[#allocation5 + $0x230] sm:$0xff]
        %v459 = vld [vmem:[#allocation5 + $0x238] sm:$0xff]
        %v460 = vld [vmem:[#allocation5 + $0x240] sm:$0xff]
        %v461 = vld [vmem:[#allocation5 + $0x248] sm:$0xff]
        %v462 = vld [vmem:[#allocation5 + $0x250] sm:$0xff]
        %v463 = vld [vmem:[#allocation5 + $0x258] sm:$0xff]
        %v464 = vld [vmem:[#allocation5 + $0x260] sm:$0xff]
        %v465 = vld [vmem:[#allocation5 + $0x268] sm:$0xff]
        %v466 = vld [vmem:[#allocation5 + $0x270] sm:$0xff]
        %v467 = vld [vmem:[#allocation5 + $0x278] sm:$0xff]
        %v468 = vld [vmem:[#allocation5 + $0x280] sm:$0xff]
        %v469 = vld [vmem:[#allocation5 + $0x288] sm:$0xff]
        %v470 = vld [vmem:[#allocation5 + $0x290] sm:$0xff]
        %v471 = vld [vmem:[#allocation5 + $0x298] sm:$0xff]
        %v472 = vld [vmem:[#allocation5 + $0x2a0] sm:$0xff]
        %v473 = vld [vmem:[#allocation5 + $0x2a8] sm:$0xff]
        %v474 = vld [vmem:[#allocation5 + $0x2b0] sm:$0xff]
        %v475 = vld [vmem:[#allocation5 + $0x2b8] sm:$0xff]
        %v476 = vld [vmem:[#allocation5 + $0x2c0] sm:$0xff]
        %v477 = vld [vmem:[#allocation5 + $0x2c8] sm:$0xff]
        %v478 = vld [vmem:[#allocation5 + $0x2d0] sm:$0xff]
        %v479 = vld [vmem:[#allocation5 + $0x2d8] sm:$0xff]
        %v480 = vld [vmem:[#allocation5 + $0x2e0] sm:$0xff]
        %v481 = vld [vmem:[#allocation5 + $0x2e8] sm:$0xff]
        %v482 = vld [vmem:[#allocation5 + $0x2f0] sm:$0xff]
        %v483 = vld [vmem:[#allocation5 + $0x2f8] sm:$0xff]
        %v484 = vld [vmem:[%s3] sm:$0x3f]
        %v486 = vlaneseq
        %v487 = vshrl.u32 %v486, 7
        %v488 = vsub.s32 0, %v487
        %v489 = vrot.slane %v484, %v488
        %v490 = vlaneseq
        %v491 = vshrl.u32 %v490, 7
        %v492 = vsub.s32 1, %v491
        %v493 = vrot.slane %v484, %v492
        %v494 = vlaneseq
        %v495 = vshrl.u32 %v494, 7
        %v496 = vsub.s32 2, %v495
        %v497 = vrot.slane %v484, %v496
        %v498 = vlaneseq
        %v499 = vshrl.u32 %v498, 7
        %v500 = vsub.s32 3, %v499
        %v501 = vrot.slane %v484, %v500
        %v502 = vlaneseq
        %v503 = vshrl.u32 %v502, 7
        %v504 = vsub.s32 4, %v503
        %v505 = vrot.slane %v484, %v504
        %v506 = vlaneseq
        %v507 = vshrl.u32 %v506, 7
        %v508 = vsub.s32 5, %v507
        %v509 = vrot.slane %v484, %v508
        %v612 = vunpack.c.l.b16 %v388
        %v613 = vunpack.c.h.b16 %v388
        %v614 = vunpack.c.l.b16 %v389
        %v615 = vunpack.c.h.b16 %v389
        %v616 = vunpack.c.l.b16 %v390
        %v617 = vunpack.c.h.b16 %v390
        %v618 = vunpack.c.l.b16 %v391
        %v619 = vunpack.c.h.b16 %v391
        %v620 = vunpack.c.l.b16 %v392
        %v621 = vunpack.c.h.b16 %v392
        %v622 = vunpack.c.l.b16 %v393
        %v623 = vunpack.c.h.b16 %v393
        %v624 = vunpack.c.l.b16 %v394
        %v625 = vunpack.c.h.b16 %v394
        %v626 = vunpack.c.l.b16 %v395
        %v627 = vunpack.c.h.b16 %v395
        %v628 = vunpack.c.l.b16 %v396
        %v629 = vunpack.c.h.b16 %v396
        %v630 = vunpack.c.l.b16 %v397
        %v631 = vunpack.c.h.b16 %v397
        %v632 = vunpack.c.l.b16 %v398
        %v633 = vunpack.c.h.b16 %v398
        %v634 = vunpack.c.l.b16 %v399
        %v635 = vunpack.c.h.b16 %v399
        %v636 = vunpack.c.l.b16 %v400
        %v637 = vunpack.c.h.b16 %v400
        %v638 = vunpack.c.l.b16 %v401
        %v639 = vunpack.c.h.b16 %v401
        %v640 = vunpack.c.l.b16 %v402
        %v641 = vunpack.c.h.b16 %v402
        %v642 = vunpack.c.l.b16 %v403
        %v643 = vunpack.c.h.b16 %v403
        %v644 = vunpack.c.l.b16 %v404
        %v645 = vunpack.c.h.b16 %v404
        %v646 = vunpack.c.l.b16 %v405
        %v647 = vunpack.c.h.b16 %v405
        %v648 = vunpack.c.l.b16 %v406
        %v649 = vunpack.c.h.b16 %v406
        %v650 = vunpack.c.l.b16 %v407
        %v651 = vunpack.c.h.b16 %v407
        %v652 = vunpack.c.l.b16 %v408
        %v653 = vunpack.c.h.b16 %v408
        %v654 = vunpack.c.l.b16 %v409
        %v655 = vunpack.c.h.b16 %v409
        %v656 = vunpack.c.l.b16 %v410
        %v657 = vunpack.c.h.b16 %v410
        %v658 = vunpack.c.l.b16 %v411
        %v659 = vunpack.c.h.b16 %v411
        %v660 = vunpack.c.l.b16 %v412
        %v661 = vunpack.c.h.b16 %v412
        %v662 = vunpack.c.l.b16 %v413
        %v663 = vunpack.c.h.b16 %v413
        %v664 = vunpack.c.l.b16 %v414
        %v665 = vunpack.c.h.b16 %v414
        %v666 = vunpack.c.l.b16 %v415
        %v667 = vunpack.c.h.b16 %v415
        %v668 = vunpack.c.l.b16 %v416
        %v669 = vunpack.c.h.b16 %v416
        %v670 = vunpack.c.l.b16 %v417
        %v671 = vunpack.c.h.b16 %v417
        %v672 = vunpack.c.l.b16 %v418
        %v673 = vunpack.c.h.b16 %v418
        %v674 = vunpack.c.l.b16 %v419
        %v675 = vunpack.c.h.b16 %v419
        %v676 = vunpack.c.l.b16 %v420
        %v677 = vunpack.c.h.b16 %v420
        %v678 = vunpack.c.l.b16 %v421
        %v679 = vunpack.c.h.b16 %v421
        %v680 = vunpack.c.l.b16 %v422
        %v681 = vunpack.c.h.b16 %v422
        %v682 = vunpack.c.l.b16 %v423
        %v683 = vunpack.c.h.b16 %v423
        %v684 = vunpack.c.l.b16 %v424
        %v685 = vunpack.c.h.b16 %v424
        %v686 = vunpack.c.l.b16 %v425
        %v687 = vunpack.c.h.b16 %v425
        %v688 = vunpack.c.l.b16 %v426
        %v689 = vunpack.c.h.b16 %v426
        %v690 = vunpack.c.l.b16 %v427
        %v691 = vunpack.c.h.b16 %v427
        %v692 = vunpack.c.l.b16 %v428
        %v693 = vunpack.c.h.b16 %v428
        %v694 = vunpack.c.l.b16 %v429
        %v695 = vunpack.c.h.b16 %v429
        %v696 = vunpack.c.l.b16 %v430
        %v697 = vunpack.c.h.b16 %v430
        %v698 = vunpack.c.l.b16 %v431
        %v699 = vunpack.c.h.b16 %v431
        %v700 = vunpack.c.l.b16 %v432
        %v701 = vunpack.c.h.b16 %v432
        %v702 = vunpack.c.l.b16 %v433
        %v703 = vunpack.c.h.b16 %v433
        %v704 = vunpack.c.l.b16 %v434
        %v705 = vunpack.c.h.b16 %v434
        %v706 = vunpack.c.l.b16 %v435
        %v707 = vunpack.c.h.b16 %v435
        %v708 = vunpack.c.l.b16 %v436
        %v709 = vunpack.c.h.b16 %v436
        %v710 = vunpack.c.l.b16 %v437
        %v711 = vunpack.c.h.b16 %v437
        %v712 = vunpack.c.l.b16 %v438
        %v713 = vunpack.c.h.b16 %v438
        %v714 = vunpack.c.l.b16 %v439
        %v715 = vunpack.c.h.b16 %v439
        %v716 = vunpack.c.l.b16 %v440
        %v717 = vunpack.c.h.b16 %v440
        %v718 = vunpack.c.l.b16 %v441
        %v719 = vunpack.c.h.b16 %v441
        %v720 = vunpack.c.l.b16 %v442
        %v721 = vunpack.c.h.b16 %v442
        %v722 = vunpack.c.l.b16 %v443
        %v723 = vunpack.c.h.b16 %v443
        %v724 = vunpack.c.l.b16 %v444
        %v725 = vunpack.c.h.b16 %v444
        %v726 = vunpack.c.l.b16 %v445
        %v727 = vunpack.c.h.b16 %v445
        %v728 = vunpack.c.l.b16 %v446
        %v729 = vunpack.c.h.b16 %v446
        %v730 = vunpack.c.l.b16 %v447
        %v731 = vunpack.c.h.b16 %v447
        %v732 = vunpack.c.l.b16 %v448
        %v733 = vunpack.c.h.b16 %v448
        %v734 = vunpack.c.l.b16 %v449
        %v735 = vunpack.c.h.b16 %v449
        %v736 = vunpack.c.l.b16 %v450
        %v737 = vunpack.c.h.b16 %v450
        %v738 = vunpack.c.l.b16 %v451
        %v739 = vunpack.c.h.b16 %v451
        %v740 = vunpack.c.l.b16 %v452
        %v741 = vunpack.c.h.b16 %v452
        %v742 = vunpack.c.l.b16 %v453
        %v743 = vunpack.c.h.b16 %v453
        %v744 = vunpack.c.l.b16 %v454
        %v745 = vunpack.c.h.b16 %v454
        %v746 = vunpack.c.l.b16 %v455
        %v747 = vunpack.c.h.b16 %v455
        %v748 = vunpack.c.l.b16 %v456
        %v749 = vunpack.c.h.b16 %v456
        %v750 = vunpack.c.l.b16 %v457
        %v751 = vunpack.c.h.b16 %v457
        %v752 = vunpack.c.l.b16 %v458
        %v753 = vunpack.c.h.b16 %v458
        %v754 = vunpack.c.l.b16 %v459
        %v755 = vunpack.c.h.b16 %v459
        %v756 = vunpack.c.l.b16 %v460
        %v757 = vunpack.c.h.b16 %v460
        %v758 = vunpack.c.l.b16 %v461
        %v759 = vunpack.c.h.b16 %v461
        %v760 = vunpack.c.l.b16 %v462
        %v761 = vunpack.c.h.b16 %v462
        %v762 = vunpack.c.l.b16 %v463
        %v763 = vunpack.c.h.b16 %v463
        %v764 = vunpack.c.l.b16 %v464
        %v765 = vunpack.c.h.b16 %v464
        %v766 = vunpack.c.l.b16 %v465
        %v767 = vunpack.c.h.b16 %v465
        %v768 = vunpack.c.l.b16 %v466
        %v769 = vunpack.c.h.b16 %v466
        %v770 = vunpack.c.l.b16 %v467
        %v771 = vunpack.c.h.b16 %v467
        %v772 = vunpack.c.l.b16 %v468
        %v773 = vunpack.c.h.b16 %v468
        %v774 = vunpack.c.l.b16 %v469
        %v775 = vunpack.c.h.b16 %v469
        %v776 = vunpack.c.l.b16 %v470
        %v777 = vunpack.c.h.b16 %v470
        %v778 = vunpack.c.l.b16 %v471
        %v779 = vunpack.c.h.b16 %v471
        %v780 = vunpack.c.l.b16 %v472
        %v781 = vunpack.c.h.b16 %v472
        %v782 = vunpack.c.l.b16 %v473
        %v783 = vunpack.c.h.b16 %v473
        %v784 = vunpack.c.l.b16 %v474
        %v785 = vunpack.c.h.b16 %v474
        %v786 = vunpack.c.l.b16 %v475
        %v787 = vunpack.c.h.b16 %v475
        %v788 = vunpack.c.l.b16 %v476
        %v789 = vunpack.c.h.b16 %v476
        %v790 = vunpack.c.l.b16 %v477
        %v791 = vunpack.c.h.b16 %v477
        %v792 = vunpack.c.l.b16 %v478
        %v793 = vunpack.c.h.b16 %v478
        %v794 = vunpack.c.l.b16 %v479
        %v795 = vunpack.c.h.b16 %v479
        %v796 = vunpack.c.l.b16 %v480
        %v797 = vunpack.c.h.b16 %v480
        %v798 = vunpack.c.l.b16 %v481
        %v799 = vunpack.c.h.b16 %v481
        %v800 = vunpack.c.l.b16 %v482
        %v801 = vunpack.c.h.b16 %v482
        %v802 = vunpack.c.l.b16 %v483
        %v803 = vunpack.c.h.b16 %v483
        %v804 = vpack.c.b16 %v618, %v612
        %v805 = vpack.c.b16 %v619, %v613
        %v806 = vpack.c.b16 %v620, %v614
        %v807 = vpack.c.b16 %v621, %v615
        %v808 = vpack.c.b16 %v622, %v616
        %v809 = vpack.c.b16 %v623, %v617
        %v810 = vpack.c.b16 %v630, %v624
        %v811 = vpack.c.b16 %v631, %v625
        %v812 = vpack.c.b16 %v632, %v626
        %v813 = vpack.c.b16 %v633, %v627
        %v814 = vpack.c.b16 %v634, %v628
        %v815 = vpack.c.b16 %v635, %v629
        %v816 = vpack.c.b16 %v642, %v636
        %v817 = vpack.c.b16 %v643, %v637
        %v818 = vpack.c.b16 %v644, %v638
        %v819 = vpack.c.b16 %v645, %v639
        %v820 = vpack.c.b16 %v646, %v640
        %v821 = vpack.c.b16 %v647, %v641
        %v822 = vpack.c.b16 %v654, %v648
        %v823 = vpack.c.b16 %v655, %v649
        %v824 = vpack.c.b16 %v656, %v650
        %v825 = vpack.c.b16 %v657, %v651
        %v826 = vpack.c.b16 %v658, %v652
        %v827 = vpack.c.b16 %v659, %v653
        %v828 = vpack.c.b16 %v666, %v660
        %v829 = vpack.c.b16 %v667, %v661
        %v830 = vpack.c.b16 %v668, %v662
        %v831 = vpack.c.b16 %v669, %v663
        %v832 = vpack.c.b16 %v670, %v664
        %v833 = vpack.c.b16 %v671, %v665
        %v834 = vpack.c.b16 %v678, %v672
        %v835 = vpack.c.b16 %v679, %v673
        %v836 = vpack.c.b16 %v680, %v674
        %v837 = vpack.c.b16 %v681, %v675
        %v838 = vpack.c.b16 %v682, %v676
        %v839 = vpack.c.b16 %v683, %v677
        %v840 = vpack.c.b16 %v690, %v684
        %v841 = vpack.c.b16 %v691, %v685
        %v842 = vpack.c.b16 %v692, %v686
        %v843 = vpack.c.b16 %v693, %v687
        %v844 = vpack.c.b16 %v694, %v688
        %v845 = vpack.c.b16 %v695, %v689
        %v846 = vpack.c.b16 %v702, %v696
        %v847 = vpack.c.b16 %v703, %v697
        %v848 = vpack.c.b16 %v704, %v698
        %v849 = vpack.c.b16 %v705, %v699
        %v850 = vpack.c.b16 %v706, %v700
        %v851 = vpack.c.b16 %v707, %v701
        %v852 = vpack.c.b16 %v714, %v708
        %v853 = vpack.c.b16 %v715, %v709
        %v854 = vpack.c.b16 %v716, %v710
        %v855 = vpack.c.b16 %v717, %v711
        %v856 = vpack.c.b16 %v718, %v712
        %v857 = vpack.c.b16 %v719, %v713
        %v858 = vpack.c.b16 %v726, %v720
        %v859 = vpack.c.b16 %v727, %v721
        %v860 = vpack.c.b16 %v728, %v722
        %v861 = vpack.c.b16 %v729, %v723
        %v862 = vpack.c.b16 %v730, %v724
        %v863 = vpack.c.b16 %v731, %v725
        %v864 = vpack.c.b16 %v738, %v732
        %v865 = vpack.c.b16 %v739, %v733
        %v866 = vpack.c.b16 %v740, %v734
        %v867 = vpack.c.b16 %v741, %v735
        %v868 = vpack.c.b16 %v742, %v736
        %v869 = vpack.c.b16 %v743, %v737
        %v870 = vpack.c.b16 %v750, %v744
        %v871 = vpack.c.b16 %v751, %v745
        %v872 = vpack.c.b16 %v752, %v746
        %v873 = vpack.c.b16 %v753, %v747
        %v874 = vpack.c.b16 %v754, %v748
        %v875 = vpack.c.b16 %v755, %v749
        %v876 = vpack.c.b16 %v762, %v756
        %v877 = vpack.c.b16 %v763, %v757
        %v878 = vpack.c.b16 %v764, %v758
        %v879 = vpack.c.b16 %v765, %v759
        %v880 = vpack.c.b16 %v766, %v760
        %v881 = vpack.c.b16 %v767, %v761
        %v882 = vpack.c.b16 %v774, %v768
        %v883 = vpack.c.b16 %v775, %v769
        %v884 = vpack.c.b16 %v776, %v770
        %v885 = vpack.c.b16 %v777, %v771
        %v886 = vpack.c.b16 %v778, %v772
        %v887 = vpack.c.b16 %v779, %v773
        %v888 = vpack.c.b16 %v786, %v780
        %v889 = vpack.c.b16 %v787, %v781
        %v890 = vpack.c.b16 %v788, %v782
        %v891 = vpack.c.b16 %v789, %v783
        %v892 = vpack.c.b16 %v790, %v784
        %v893 = vpack.c.b16 %v791, %v785
        %v894 = vpack.c.b16 %v798, %v792
        %v895 = vpack.c.b16 %v799, %v793
        %v896 = vpack.c.b16 %v800, %v794
        %v897 = vpack.c.b16 %v801, %v795
        %v898 = vpack.c.b16 %v802, %v796
        %v899 = vpack.c.b16 %v803, %v797
        %996 = vmatprep.subr.bf16.mxu0 %v847
        %997 = vmatpush1.bf16.msra.mxu0 %v846
        %998 = vmatprep.subr.bf16.mxu0 %v841
        %999 = vmatpush1.bf16.msra.mxu0 %v840
        %1000 = vmatprep.subr.bf16.mxu0 %v835
        %1001 = vmatpush1.bf16.msra.mxu0 %v834
        %1002 = vmatprep.subr.bf16.mxu0 %v829
        %1003 = vmatpush1.bf16.msra.mxu0 %v828
        %1004 = vmatprep.subr.bf16.mxu0 %v823
        %1005 = vmatpush1.bf16.msra.mxu0 %v822
        %1006 = vmatprep.subr.bf16.mxu0 %v817
        %1007 = vmatpush1.bf16.msra.mxu0 %v816
        %1008 = vmatprep.subr.bf16.mxu0 %v811
        %1009 = vmatpush1.bf16.msra.mxu0 %v810
        %1010 = vmatprep.subr.bf16.mxu0 %v805
        %1011 = vmatpush1.bf16.msra.mxu0 %v804
        %1012 = vmatprep.subr.bf16.mxu0 %v895
        %1013 = vmatpush2.bf16.msra.mxu0 %v894
        %1014 = vmatprep.subr.bf16.mxu0 %v889
        %1015 = vmatpush2.bf16.msra.mxu0 %v888
        %1016 = vmatprep.subr.bf16.mxu0 %v883
        %1017 = vmatpush2.bf16.msra.mxu0 %v882
        %1018 = vmatprep.subr.bf16.mxu0 %v877
        %1019 = vmatpush2.bf16.msra.mxu0 %v876
        %1020 = vmatprep.subr.bf16.mxu0 %v871
        %1021 = vmatpush2.bf16.msra.mxu0 %v870
        %1022 = vmatprep.subr.bf16.mxu0 %v865
        %1023 = vmatpush2.bf16.msra.mxu0 %v864
        %1024 = vmatprep.subr.bf16.mxu0 %v859
        %1025 = vmatpush2.bf16.msra.mxu0 %v858
        %1026 = vmatprep.subr.bf16.mxu0 %v853
        %1027 = vmatpush2.bf16.msra.mxu0 %v852
        %1028 = vmatprep.mubr.bf16.mxu0 %v387
        %1029 = vmatmul.mubr.bf16.gmra.mxu0 %v386
        %v1030 = vpop.f32.mrf.mxu0
        %v1031 = vadd.f32 %v489, %v1030
        %v1032 = vpop.f32.mrf.mxu0
        %v1033 = vadd.f32 %v493, %v1032
        %v1034 = vpop.f32.mrf.mxu0
        %v1035 = vpop.f32.mrf.mxu0
        %1036 = vdwg.mxu0
        %1037 = vmatprep.subr.bf16.mxu0 %v849
        %1038 = vmatpush1.bf16.msra.mxu0 %v848
        %1039 = vmatprep.subr.bf16.mxu0 %v843
        %1040 = vmatpush1.bf16.msra.mxu0 %v842
        %1041 = vmatprep.subr.bf16.mxu0 %v837
        %1042 = vmatpush1.bf16.msra.mxu0 %v836
        %1043 = vmatprep.subr.bf16.mxu0 %v831
        %1044 = vmatpush1.bf16.msra.mxu0 %v830
        %1045 = vmatprep.subr.bf16.mxu0 %v825
        %1046 = vmatpush1.bf16.msra.mxu0 %v824
        %1047 = vmatprep.subr.bf16.mxu0 %v819
        %1048 = vmatpush1.bf16.msra.mxu0 %v818
        %1049 = vmatprep.subr.bf16.mxu0 %v813
        %1050 = vmatpush1.bf16.msra.mxu0 %v812
        %1051 = vmatprep.subr.bf16.mxu0 %v807
        %1052 = vmatpush1.bf16.msra.mxu0 %v806
        %1053 = vmatprep.subr.bf16.mxu0 %v897
        %1054 = vmatpush2.bf16.msra.mxu0 %v896
        %1055 = vmatprep.subr.bf16.mxu0 %v891
        %1056 = vmatpush2.bf16.msra.mxu0 %v890
        %1057 = vmatprep.subr.bf16.mxu0 %v885
        %1058 = vmatpush2.bf16.msra.mxu0 %v884
        %1059 = vmatprep.subr.bf16.mxu0 %v879
        %1060 = vmatpush2.bf16.msra.mxu0 %v878
        %1061 = vmatprep.subr.bf16.mxu0 %v873
        %1062 = vmatpush2.bf16.msra.mxu0 %v872
        %1063 = vmatprep.subr.bf16.mxu0 %v867
        %1064 = vmatpush2.bf16.msra.mxu0 %v866
        %1065 = vmatprep.subr.bf16.mxu0 %v861
        %1066 = vmatpush2.bf16.msra.mxu0 %v860
        %1067 = vmatprep.subr.bf16.mxu0 %v855
        %1068 = vmatpush2.bf16.msra.mxu0 %v854
        %1069 = vmatprep.mubr.bf16.mxu0 %v387
        %1070 = vmatmul.mubr.bf16.gmra.mxu0 %v386
        %v1071 = vpop.f32.mrf.mxu0
        %v1072 = vadd.f32 %v497, %v1071
        %v1073 = vpop.f32.mrf.mxu0
        %v1074 = vadd.f32 %v501, %v1073
        %v1075 = vpop.f32.mrf.mxu0
        %v1076 = vpop.f32.mrf.mxu0
        %1077 = vdwg.mxu0
        %1078 = vmatprep.subr.bf16.mxu0 %v851
        %1079 = vmatpush1.bf16.msra.mxu0 %v850
        %1080 = vmatprep.subr.bf16.mxu0 %v845
        %1081 = vmatpush1.bf16.msra.mxu0 %v844
        %1082 = vmatprep.subr.bf16.mxu0 %v839
        %1083 = vmatpush1.bf16.msra.mxu0 %v838
        %1084 = vmatprep.subr.bf16.mxu0 %v833
        %1085 = vmatpush1.bf16.msra.mxu0 %v832
        %1086 = vmatprep.subr.bf16.mxu0 %v827
        %1087 = vmatpush1.bf16.msra.mxu0 %v826
        %1088 = vmatprep.subr.bf16.mxu0 %v821
        %1089 = vmatpush1.bf16.msra.mxu0 %v820
        %1090 = vmatprep.subr.bf16.mxu0 %v815
        %1091 = vmatpush1.bf16.msra.mxu0 %v814
        %1092 = vmatprep.subr.bf16.mxu0 %v809
        %1093 = vmatpush1.bf16.msra.mxu0 %v808
        %1094 = vmatprep.subr.bf16.mxu0 %v899
        %1095 = vmatpush2.bf16.msra.mxu0 %v898
        %1096 = vmatprep.subr.bf16.mxu0 %v893
        %1097 = vmatpush2.bf16.msra.mxu0 %v892
        %1098 = vmatprep.subr.bf16.mxu0 %v887
        %1099 = vmatpush2.bf16.msra.mxu0 %v886
        %1100 = vmatprep.subr.bf16.mxu0 %v881
        %1101 = vmatpush2.bf16.msra.mxu0 %v880
        %1102 = vmatprep.subr.bf16.mxu0 %v875
        %1103 = vmatpush2.bf16.msra.mxu0 %v874
        %1104 = vmatprep.subr.bf16.mxu0 %v869
        %1105 = vmatpush2.bf16.msra.mxu0 %v868
        %1106 = vmatprep.subr.bf16.mxu0 %v863
        %1107 = vmatpush2.bf16.msra.mxu0 %v862
        %1108 = vmatprep.subr.bf16.mxu0 %v857
        %1109 = vmatpush2.bf16.msra.mxu0 %v856
        %1110 = vmatprep.mubr.bf16.mxu0 %v387
        %1111 = vmatmul.mubr.bf16.gmra.mxu0 %v386
        %v1112 = vpop.f32.mrf.mxu0
        %v1113 = vadd.f32 %v505, %v1112
        %v1114 = vpop.f32.mrf.mxu0
        %v1115 = vadd.f32 %v509, %v1114
        %v1116 = vpop.f32.mrf.mxu0
        %v1117 = vpop.f32.mrf.mxu0
        %1118 = vdwg.mxu0
        %v1119 = vpack.c.bf16 %v1031, %v1031
        %v1120 = vpack.c.bf16 %v1033, %v1033
        %v1121 = vpack.c.bf16 %v1072, %v1072
        %v1122 = vpack.c.bf16 %v1074, %v1074
        %v1123 = vpack.c.bf16 %v1113, %v1113
        %v1124 = vpack.c.bf16 %v1115, %v1115
        %v1125 = vlaneseq
        %v1126 = vshrl.u32 %v1125, 7
        %v1127 = vlaneseq
        %v1128 = vand.u32 %v1127, 127
        %vm1129 = vcmp.le.s32.totalorder %v1128, %v1126
        %v1130 = vld [vmem:[%s382] sm:$0xff]
        %vm1131 = vcmp.gt.f32.partialorder %v1130, 0.0
        %v1132 = vsel %vm1129, 1, 0
        %vm1133 = vcmp.eq.s32.totalorder %v1132, 1
        %v1134 = vsel %vm1131, 1, 0
        %1135 = vset.pattern.permute.xlu0 0
        %1136 = vperm.xlu0 %1135, %v1134
        %v1137 = vpop.permute.xlu0 %1136
        %vm1138 = vcmp.eq.s32.totalorder %v1137, 1
        %vm1139 = vmand %vm1133, %vm1138
        %1140 = vmatprep.subr.bf16.mxu0 0
        %1141 = vmatpush1.bf16.xpose.msra.mxu0 0
        %1142 = vmatprep.subr.bf16.mxu0 0
        %1143 = vmatpush1.bf16.xpose.msra.mxu0 0
        %1144 = vmatprep.subr.bf16.mxu0 0
        %1145 = vmatpush1.bf16.xpose.msra.mxu0 0
        %1146 = vmatprep.subr.bf16.mxu0 0
        %1147 = vmatpush1.bf16.xpose.msra.mxu0 0
        %1148 = vmatprep.subr.bf16.mxu0 0
        %1149 = vmatpush1.bf16.xpose.msra.mxu0 0
        %1150 = vmatprep.subr.bf16.mxu0 0
        %1151 = vmatpush1.bf16.xpose.msra.mxu0 0
        %1152 = vmatprep.subr.bf16.mxu0 0
        %1153 = vmatpush1.bf16.xpose.msra.mxu0 0
        %1154 = vmatprep.subr.bf16.mxu0 0
        %1155 = vmatpush1.bf16.xpose.msra.mxu0 %v1121
        %1156 = vmatprep.subr.bf16.mxu0 0
        %1157 = vmatpush2.bf16.xpose.msra.mxu0 0
        %1158 = vmatprep.subr.bf16.mxu0 0
        %1159 = vmatpush2.bf16.xpose.msra.mxu0 0
        %1160 = vmatprep.subr.bf16.mxu0 0
        %1161 = vmatpush2.bf16.xpose.msra.mxu0 0
        %1162 = vmatprep.subr.bf16.mxu0 0
        %1163 = vmatpush2.bf16.xpose.msra.mxu0 0
        %1164 = vmatprep.subr.bf16.mxu0 0
        %1165 = vmatpush2.bf16.xpose.msra.mxu0 0
        %1166 = vmatprep.subr.bf16.mxu0 0
        %1167 = vmatpush2.bf16.xpose.msra.mxu0 0
        %1168 = vmatprep.subr.bf16.mxu0 0
        %1169 = vmatpush2.bf16.xpose.msra.mxu0 0
        %1170 = vmatprep.subr.bf16.mxu0 0
        %1171 = vmatpush2.bf16.xpose.msra.mxu0 0
        %1172 = vmatprep.mubr.bf16.mxu0 0
        %1173 = vmatmul.mubr.bf16.gmra.mxu0 %v1119
        %v1174 = vpop.f32.mrf.mxu0
        %v1175 = vadd.f32 0.0, %v1174
        %v1176 = vpop.f32.mrf.mxu0
        %v1177 = vpop.f32.mrf.mxu0
        %v1178 = vpop.f32.mrf.mxu0
        %1179 = vdwg.mxu0
        %1180 = vmatprep.subr.bf16.mxu0 0
        %1181 = vmatpush1.bf16.xpose.msra.mxu0 0
        %1182 = vmatprep.subr.bf16.mxu0 0
        %1183 = vmatpush1.bf16.xpose.msra.mxu0 0
        %1184 = vmatprep.subr.bf16.mxu0 0
        %1185 = vmatpush1.bf16.xpose.msra.mxu0 0
        %1186 = vmatprep.subr.bf16.mxu0 0
        %1187 = vmatpush1.bf16.xpose.msra.mxu0 0
        %1188 = vmatprep.subr.bf16.mxu0 0
        %1189 = vmatpush1.bf16.xpose.msra.mxu0 0
        %1190 = vmatprep.subr.bf16.mxu0 0
        %1191 = vmatpush1.bf16.xpose.msra.mxu0 0
        %1192 = vmatprep.subr.bf16.mxu0 0
        %1193 = vmatpush1.bf16.xpose.msra.mxu0 0
        %1194 = vmatprep.subr.bf16.mxu0 0
        %1195 = vmatpush1.bf16.xpose.msra.mxu0 %v1122
        %1196 = vmatprep.subr.bf16.mxu0 0
        %1197 = vmatpush2.bf16.xpose.msra.mxu0 0
        %1198 = vmatprep.subr.bf16.mxu0 0
        %1199 = vmatpush2.bf16.xpose.msra.mxu0 0
        %1200 = vmatprep.subr.bf16.mxu0 0
        %1201 = vmatpush2.bf16.xpose.msra.mxu0 0
        %1202 = vmatprep.subr.bf16.mxu0 0
        %1203 = vmatpush2.bf16.xpose.msra.mxu0 0
        %1204 = vmatprep.subr.bf16.mxu0 0
        %1205 = vmatpush2.bf16.xpose.msra.mxu0 0
        %1206 = vmatprep.subr.bf16.mxu0 0
        %1207 = vmatpush2.bf16.xpose.msra.mxu0 0
        %1208 = vmatprep.subr.bf16.mxu0 0
        %1209 = vmatpush2.bf16.xpose.msra.mxu0 0
        %1210 = vmatprep.subr.bf16.mxu0 0
        %1211 = vmatpush2.bf16.xpose.msra.mxu0 0
        %1212 = vmatprep.mubr.bf16.mxu0 0
        %1213 = vmatmul.mubr.bf16.gmra.mxu0 %v1120
        %v1214 = vpop.f32.mrf.mxu0
        %v1215 = vadd.f32 0.0, %v1214
        %v1216 = vpop.f32.mrf.mxu0
        %v1217 = vpop.f32.mrf.mxu0
        %v1218 = vpop.f32.mrf.mxu0
        %1219 = vdwg.mxu0
        %v1220 = vsel %vm1139, %v1175, -1e+09
        %v1221 = vsel %vm1139, %v1215, -1e+09
        %vm1222 = vcmask 64512
        %v1223 = vsel %vm1222, %v1220, -inf
        %1224 = vmax.xlane.f32.xlu0 %v1223
        %v1225 = vpop.xlane.xlu0 %1224
        %v1226 = vsel %vm1222, %v1221, -inf
        %1227 = vmax.xlane.f32.xlu0 %v1226
        %v1228 = vpop.xlane.xlu0 %1227
        %v1229 = vsub.f32 %v1220, %v1225
        %v1230 = vsub.f32 %v1221, %v1228
        %v1231 = vmul.f32 %v1229, 1.442695
        %v1232 = vpow.pop %v1231
        %v1233 = vmul.f32 %v1230, 1.442695
        %v1234 = vpow.pop %v1233
        %v1235 = vsel %vm1222, %v1232, 0.0
        %1236 = vadd.xlane.f32.xlu0 %v1235
        %v1237 = vpop.xlane.xlu0 %1236
        %v1238 = vsel %vm1222, %v1234, 0.0
        %1239 = vadd.xlane.f32.xlu0 %v1238
        %v1240 = vpop.xlane.xlu0 %1239
        %v1241 = vrcp.pop %v1237
        %v1242 = vmul.f32 %v1232, %v1241
        %v1243 = vrcp.pop %v1240
        %v1244 = vmul.f32 %v1234, %v1243
        %v1245 = vpack.c.bf16 %v1242, %v1242
        %v1246 = vpack.c.bf16 %v1244, %v1244
        %v1248 = vsel %vm1222, %v1245, 0
        %vm1250 = vcmask 1043456
        %v1252 = vsel %vm1250, %v1123, 0
        %1254 = vmatprep.subr.bf16.mxu0 0
        %1255 = vmatpush1.bf16.msra.mxu0 0
        %1256 = vmatprep.subr.bf16.mxu0 0
        %1257 = vmatpush1.bf16.msra.mxu0 0
        %1258 = vmatprep.subr.bf16.mxu0 0
        %1259 = vmatpush1.bf16.msra.mxu0 0
        %1260 = vmatprep.subr.bf16.mxu0 0
        %1261 = vmatpush1.bf16.msra.mxu0 0
        %1262 = vmatprep.subr.bf16.mxu0 0
        %1263 = vmatpush1.bf16.msra.mxu0 0
        %1264 = vmatprep.subr.bf16.mxu0 0
        %1265 = vmatpush1.bf16.msra.mxu0 0
        %1266 = vmatprep.subr.bf16.mxu0 0
        %1267 = vmatpush1.bf16.msra.mxu0 0
        %1268 = vmatprep.subr.bf16.mxu0 0
        %1269 = vmatpush1.bf16.msra.mxu0 %v1252
        %1270 = vmatprep.subr.bf16.mxu0 0
        %1271 = vmatpush2.bf16.msra.mxu0 0
        %1272 = vmatprep.subr.bf16.mxu0 0
        %1273 = vmatpush2.bf16.msra.mxu0 0
        %1274 = vmatprep.subr.bf16.mxu0 0
        %1275 = vmatpush2.bf16.msra.mxu0 0
        %1276 = vmatprep.subr.bf16.mxu0 0
        %1277 = vmatpush2.bf16.msra.mxu0 0
        %1278 = vmatprep.subr.bf16.mxu0 0
        %1279 = vmatpush2.bf16.msra.mxu0 0
        %1280 = vmatprep.subr.bf16.mxu0 0
        %1281 = vmatpush2.bf16.msra.mxu0 0
        %1282 = vmatprep.subr.bf16.mxu0 0
        %1283 = vmatpush2.bf16.msra.mxu0 0
        %1284 = vmatprep.subr.bf16.mxu0 0
        %1285 = vmatpush2.bf16.msra.mxu0 0
        %1286 = vmatprep.mubr.bf16.mxu0 0
        %1287 = vmatmul.mubr.bf16.gmra.mxu0 %v1248
        %v1288 = vpop.f32.mrf.mxu0
        %v1289 = vadd.f32 0.0, %v1288
        %v1290 = vpop.f32.mrf.mxu0
        %v1291 = vpop.f32.mrf.mxu0
        %v1292 = vpop.f32.mrf.mxu0
        %1293 = vdwg.mxu0
        %v1295 = vsel %vm1222, %v1246, 0
        %v1298 = vsel %vm1250, %v1124, 0
        %1300 = vmatprep.subr.bf16.mxu0 0
        %1301 = vmatpush1.bf16.msra.mxu0 0
        %1302 = vmatprep.subr.bf16.mxu0 0
        %1303 = vmatpush1.bf16.msra.mxu0 0
        %1304 = vmatprep.subr.bf16.mxu0 0
        %1305 = vmatpush1.bf16.msra.mxu0 0
        %1306 = vmatprep.subr.bf16.mxu0 0
        %1307 = vmatpush1.bf16.msra.mxu0 0
        %1308 = vmatprep.subr.bf16.mxu0 0
        %1309 = vmatpush1.bf16.msra.mxu0 0
        %1310 = vmatprep.subr.bf16.mxu0 0
        %1311 = vmatpush1.bf16.msra.mxu0 0
        %1312 = vmatprep.subr.bf16.mxu0 0
        %1313 = vmatpush1.bf16.msra.mxu0 0
        %1314 = vmatprep.subr.bf16.mxu0 0
        %1315 = vmatpush1.bf16.msra.mxu0 %v1298
        %1316 = vmatprep.subr.bf16.mxu0 0
        %1317 = vmatpush2.bf16.msra.mxu0 0
        %1318 = vmatprep.subr.bf16.mxu0 0
        %1319 = vmatpush2.bf16.msra.mxu0 0
        %1320 = vmatprep.subr.bf16.mxu0 0
        %1321 = vmatpush2.bf16.msra.mxu0 0
        %1322 = vmatprep.subr.bf16.mxu0 0
        %1323 = vmatpush2.bf16.msra.mxu0 0
        %1324 = vmatprep.subr.bf16.mxu0 0
        %1325 = vmatpush2.bf16.msra.mxu0 0
        %1326 = vmatprep.subr.bf16.mxu0 0
        %1327 = vmatpush2.bf16.msra.mxu0 0
        %1328 = vmatprep.subr.bf16.mxu0 0
        %1329 = vmatpush2.bf16.msra.mxu0 0
        %1330 = vmatprep.subr.bf16.mxu0 0
        %1331 = vmatpush2.bf16.msra.mxu0 0
        %1332 = vmatprep.mubr.bf16.mxu0 0
        %1333 = vmatmul.mubr.bf16.gmra.mxu0 %v1295
        %v1334 = vpop.f32.mrf.mxu0
        %v1335 = vadd.f32 0.0, %v1334
        %v1336 = vpop.f32.mrf.mxu0
        %v1337 = vpop.f32.mrf.mxu0
        %v1338 = vpop.f32.mrf.mxu0
        %1339 = vdwg.mxu0
        %v1340 = vadd.f32 %v384, %v1289
        %v1341 = vadd.f32 %v385, %v1335
        %v1342 = vpack.c.bf16 %v1340, %v1340
        %v1343 = vpack.c.bf16 %v1341, %v1341
        %v1344 = vld [vmem:[#allocation7] sm:$0xf]
        %v1345 = vld [vmem:[#allocation7 + $0x4] sm:$0xf]
        %v1346 = vld [vmem:[#allocation7 + $0x8] sm:$0xf]
        %v1347 = vld [vmem:[#allocation7 + $0xc] sm:$0xf]
        %v1348 = vld [vmem:[#allocation7 + $0x10] sm:$0xf]
        %v1349 = vld [vmem:[#allocation7 + $0x14] sm:$0xf]
        %v1350 = vld [vmem:[#allocation7 + $0x18] sm:$0xf]
        %v1351 = vld [vmem:[#allocation7 + $0x1c] sm:$0xf]
        %v1352 = vld [vmem:[#allocation7 + $0x20] sm:$0xf]
        %v1353 = vld [vmem:[#allocation7 + $0x24] sm:$0xf]
        %v1354 = vld [vmem:[#allocation7 + $0x28] sm:$0xf]
        %v1355 = vld [vmem:[#allocation7 + $0x2c] sm:$0xf]
        %v1356 = vld [vmem:[#allocation7 + $0x30] sm:$0xf]
        %v1357 = vld [vmem:[#allocation7 + $0x34] sm:$0xf]
        %v1358 = vld [vmem:[#allocation7 + $0x38] sm:$0xf]
        %v1359 = vld [vmem:[#allocation7 + $0x3c] sm:$0xf]
        %v1360 = vld [vmem:[#allocation7 + $0x40] sm:$0xf]
        %v1361 = vld [vmem:[#allocation7 + $0x44] sm:$0xf]
        %v1362 = vld [vmem:[#allocation7 + $0x48] sm:$0xf]
        %v1363 = vld [vmem:[#allocation7 + $0x4c] sm:$0xf]
        %v1364 = vld [vmem:[#allocation7 + $0x50] sm:$0xf]
        %v1365 = vld [vmem:[#allocation7 + $0x54] sm:$0xf]
        %v1366 = vld [vmem:[#allocation7 + $0x58] sm:$0xf]
        %v1367 = vld [vmem:[#allocation7 + $0x5c] sm:$0xf]
        %v1368 = vld [vmem:[#allocation7 + $0x60] sm:$0xf]
        %v1369 = vld [vmem:[#allocation7 + $0x64] sm:$0xf]
        %v1370 = vld [vmem:[#allocation7 + $0x68] sm:$0xf]
        %v1371 = vld [vmem:[#allocation7 + $0x6c] sm:$0xf]
        %v1372 = vld [vmem:[#allocation7 + $0x70] sm:$0xf]
        %v1373 = vld [vmem:[#allocation7 + $0x74] sm:$0xf]
        %v1374 = vld [vmem:[#allocation7 + $0x78] sm:$0xf]
        %v1375 = vld [vmem:[#allocation7 + $0x7c] sm:$0xf]
        %v1376 = vld [vmem:[%s5] sm:$0x1]
        %v1378 = vlaneseq
        %v1379 = vshrl.u32 %v1378, 7
        %v1380 = vsub.s32 0, %v1379
        %v1381 = vrot.slane %v1376, %v1380
        %v1415 = vunpack.c.l.b16 %v1344
        %v1416 = vunpack.c.l.b16 %v1345
        %v1417 = vunpack.c.l.b16 %v1346
        %v1418 = vunpack.c.l.b16 %v1347
        %v1419 = vunpack.c.l.b16 %v1348
        %v1420 = vunpack.c.l.b16 %v1349
        %v1421 = vunpack.c.l.b16 %v1350
        %v1422 = vunpack.c.l.b16 %v1351
        %v1423 = vunpack.c.l.b16 %v1352
        %v1424 = vunpack.c.l.b16 %v1353
        %v1425 = vunpack.c.l.b16 %v1354
        %v1426 = vunpack.c.l.b16 %v1355
        %v1427 = vunpack.c.l.b16 %v1356
        %v1428 = vunpack.c.l.b16 %v1357
        %v1429 = vunpack.c.l.b16 %v1358
        %v1430 = vunpack.c.l.b16 %v1359
        %v1431 = vunpack.c.l.b16 %v1360
        %v1432 = vunpack.c.l.b16 %v1361
        %v1433 = vunpack.c.l.b16 %v1362
        %v1434 = vunpack.c.l.b16 %v1363
        %v1435 = vunpack.c.l.b16 %v1364
        %v1436 = vunpack.c.l.b16 %v1365
        %v1437 = vunpack.c.l.b16 %v1366
        %v1438 = vunpack.c.l.b16 %v1367
        %v1439 = vunpack.c.l.b16 %v1368
        %v1440 = vunpack.c.l.b16 %v1369
        %v1441 = vunpack.c.l.b16 %v1370
        %v1442 = vunpack.c.l.b16 %v1371
        %v1443 = vunpack.c.l.b16 %v1372
        %v1444 = vunpack.c.l.b16 %v1373
        %v1445 = vunpack.c.l.b16 %v1374
        %v1446 = vunpack.c.l.b16 %v1375
        %v1447 = vpack.c.b16 %v1416, %v1415
        %v1448 = vpack.c.b16 %v1418, %v1417
        %v1449 = vpack.c.b16 %v1420, %v1419
        %v1450 = vpack.c.b16 %v1422, %v1421
        %v1451 = vpack.c.b16 %v1424, %v1423
        %v1452 = vpack.c.b16 %v1426, %v1425
        %v1453 = vpack.c.b16 %v1428, %v1427
        %v1454 = vpack.c.b16 %v1430, %v1429
        %v1455 = vpack.c.b16 %v1432, %v1431
        %v1456 = vpack.c.b16 %v1434, %v1433
        %v1457 = vpack.c.b16 %v1436, %v1435
        %v1458 = vpack.c.b16 %v1438, %v1437
        %v1459 = vpack.c.b16 %v1440, %v1439
        %v1460 = vpack.c.b16 %v1442, %v1441
        %v1461 = vpack.c.b16 %v1444, %v1443
        %v1462 = vpack.c.b16 %v1446, %v1445
        %1479 = vmatprep.subr.bf16.mxu0 0
        %1480 = vmatpush1.bf16.msra.mxu0 %v1454
        %1481 = vmatprep.subr.bf16.mxu0 0
        %1482 = vmatpush1.bf16.msra.mxu0 %v1453
        %1483 = vmatprep.subr.bf16.mxu0 0
        %1484 = vmatpush1.bf16.msra.mxu0 %v1452
        %1485 = vmatprep.subr.bf16.mxu0 0
        %1486 = vmatpush1.bf16.msra.mxu0 %v1451
        %1487 = vmatprep.subr.bf16.mxu0 0
        %1488 = vmatpush1.bf16.msra.mxu0 %v1450
        %1489 = vmatprep.subr.bf16.mxu0 0
        %1490 = vmatpush1.bf16.msra.mxu0 %v1449
        %1491 = vmatprep.subr.bf16.mxu0 0
        %1492 = vmatpush1.bf16.msra.mxu0 %v1448
        %1493 = vmatprep.subr.bf16.mxu0 0
        %1494 = vmatpush1.bf16.msra.mxu0 %v1447
        %1495 = vmatprep.subr.bf16.mxu0 0
        %1496 = vmatpush2.bf16.msra.mxu0 %v1462
        %1497 = vmatprep.subr.bf16.mxu0 0
        %1498 = vmatpush2.bf16.msra.mxu0 %v1461
        %1499 = vmatprep.subr.bf16.mxu0 0
        %1500 = vmatpush2.bf16.msra.mxu0 %v1460
        %1501 = vmatprep.subr.bf16.mxu0 0
        %1502 = vmatpush2.bf16.msra.mxu0 %v1459
        %1503 = vmatprep.subr.bf16.mxu0 0
        %1504 = vmatpush2.bf16.msra.mxu0 %v1458
        %1505 = vmatprep.subr.bf16.mxu0 0
        %1506 = vmatpush2.bf16.msra.mxu0 %v1457
        %1507 = vmatprep.subr.bf16.mxu0 0
        %1508 = vmatpush2.bf16.msra.mxu0 %v1456
        %1509 = vmatprep.subr.bf16.mxu0 0
        %1510 = vmatpush2.bf16.msra.mxu0 %v1455
        %1511 = vmatprep.mubr.bf16.mxu0 %v1343
        %1512 = vmatmul.mubr.bf16.gmra.mxu0 %v1342
        %v1513 = vpop.f32.mrf.mxu0
        %v1514 = vadd.f32 %v1381, %v1513
        %v1515 = vpop.f32.mrf.mxu0
        %v1516 = vpop.f32.mrf.mxu0
        %v1517 = vpop.f32.mrf.mxu0
        %1518 = vdwg.mxu0
        %v1519 = vmax.f32 %v1514, 0.0
        %v1520 = vpack.c.bf16 %v1519, %v1519
        %v1521 = vld [vmem:[#allocation8] sm:$0xff]
        %v1522 = vld [vmem:[#allocation8 + $0x8] sm:$0xff]
        %v1523 = vld [vmem:[#allocation8 + $0x10] sm:$0xff]
        %v1524 = vld [vmem:[#allocation8 + $0x18] sm:$0xff]
        %v1525 = vld [vmem:[#allocation8 + $0x20] sm:$0xff]
        %v1526 = vld [vmem:[#allocation8 + $0x28] sm:$0xff]
        %v1527 = vld [vmem:[#allocation8 + $0x30] sm:$0xff]
        %v1528 = vld [vmem:[#allocation8 + $0x38] sm:$0xff]
        %v1529 = vld [vmem:[#allocation8 + $0x40] sm:$0xff]
        %v1530 = vld [vmem:[#allocation8 + $0x48] sm:$0xff]
        %v1531 = vld [vmem:[#allocation8 + $0x50] sm:$0xff]
        %v1532 = vld [vmem:[#allocation8 + $0x58] sm:$0xff]
        %v1533 = vld [vmem:[#allocation8 + $0x60] sm:$0xff]
        %v1534 = vld [vmem:[#allocation8 + $0x68] sm:$0xff]
        %v1535 = vld [vmem:[#allocation8 + $0x70] sm:$0xff]
        %v1536 = vld [vmem:[#allocation8 + $0x78] sm:$0xff]
        %v1537 = vld [vmem:[%s7] sm:$0x3]
        %v1539 = vlaneseq
        %v1540 = vshrl.u32 %v1539, 7
        %v1541 = vsub.s32 0, %v1540
        %v1542 = vrot.slane %v1537, %v1541
        %v1543 = vlaneseq
        %v1544 = vshrl.u32 %v1543, 7
        %v1545 = vsub.s32 1, %v1544
        %v1546 = vrot.slane %v1537, %v1545
        %v1565 = vunpack.c.l.b16 %v1521
        %v1566 = vunpack.c.h.b16 %v1521
        %v1567 = vunpack.c.l.b16 %v1522
        %v1568 = vunpack.c.h.b16 %v1522
        %v1569 = vunpack.c.l.b16 %v1523
        %v1570 = vunpack.c.h.b16 %v1523
        %v1571 = vunpack.c.l.b16 %v1524
        %v1572 = vunpack.c.h.b16 %v1524
        %v1573 = vunpack.c.l.b16 %v1525
        %v1574 = vunpack.c.h.b16 %v1525
        %v1575 = vunpack.c.l.b16 %v1526
        %v1576 = vunpack.c.h.b16 %v1526
        %v1577 = vunpack.c.l.b16 %v1527
        %v1578 = vunpack.c.h.b16 %v1527
        %v1579 = vunpack.c.l.b16 %v1528
        %v1580 = vunpack.c.h.b16 %v1528
        %v1581 = vunpack.c.l.b16 %v1529
        %v1582 = vunpack.c.h.b16 %v1529
        %v1583 = vunpack.c.l.b16 %v1530
        %v1584 = vunpack.c.h.b16 %v1530
        %v1585 = vunpack.c.l.b16 %v1531
        %v1586 = vunpack.c.h.b16 %v1531
        %v1587 = vunpack.c.l.b16 %v1532
        %v1588 = vunpack.c.h.b16 %v1532
        %v1589 = vunpack.c.l.b16 %v1533
        %v1590 = vunpack.c.h.b16 %v1533
        %v1591 = vunpack.c.l.b16 %v1534
        %v1592 = vunpack.c.h.b16 %v1534
        %v1593 = vunpack.c.l.b16 %v1535
        %v1594 = vunpack.c.h.b16 %v1535
        %v1595 = vunpack.c.l.b16 %v1536
        %v1596 = vunpack.c.h.b16 %v1536
        %v1597 = vpack.c.b16 %v1567, %v1565
        %v1598 = vpack.c.b16 %v1568, %v1566
        %v1599 = vpack.c.b16 %v1571, %v1569
        %v1600 = vpack.c.b16 %v1572, %v1570
        %v1601 = vpack.c.b16 %v1575, %v1573
        %v1602 = vpack.c.b16 %v1576, %v1574
        %v1603 = vpack.c.b16 %v1579, %v1577
        %v1604 = vpack.c.b16 %v1580, %v1578
        %v1605 = vpack.c.b16 %v1583, %v1581
        %v1606 = vpack.c.b16 %v1584, %v1582
        %v1607 = vpack.c.b16 %v1587, %v1585
        %v1608 = vpack.c.b16 %v1588, %v1586
        %v1609 = vpack.c.b16 %v1591, %v1589
        %v1610 = vpack.c.b16 %v1592, %v1590
        %v1611 = vpack.c.b16 %v1595, %v1593
        %v1612 = vpack.c.b16 %v1596, %v1594
        %1629 = vmatprep.subr.bf16.mxu0 %v1612
        %1630 = vmatpush1.bf16.msra.mxu0 %v1611
        %1631 = vmatprep.subr.bf16.mxu0 %v1610
        %1632 = vmatpush1.bf16.msra.mxu0 %v1609
        %1633 = vmatprep.subr.bf16.mxu0 %v1608
        %1634 = vmatpush1.bf16.msra.mxu0 %v1607
        %1635 = vmatprep.subr.bf16.mxu0 %v1606
        %1636 = vmatpush1.bf16.msra.mxu0 %v1605
        %1637 = vmatprep.subr.bf16.mxu0 %v1604
        %1638 = vmatpush1.bf16.msra.mxu0 %v1603
        %1639 = vmatprep.subr.bf16.mxu0 %v1602
        %1640 = vmatpush1.bf16.msra.mxu0 %v1601
        %1641 = vmatprep.subr.bf16.mxu0 %v1600
        %1642 = vmatpush1.bf16.msra.mxu0 %v1599
        %1643 = vmatprep.subr.bf16.mxu0 %v1598
        %1644 = vmatpush1.bf16.msra.mxu0 %v1597
        %1645 = vmatprep.subr.bf16.mxu0 0
        %1646 = vmatpush2.bf16.msra.mxu0 0
        %1647 = vmatprep.subr.bf16.mxu0 0
        %1648 = vmatpush2.bf16.msra.mxu0 0
        %1649 = vmatprep.subr.bf16.mxu0 0
        %1650 = vmatpush2.bf16.msra.mxu0 0
        %1651 = vmatprep.subr.bf16.mxu0 0
        %1652 = vmatpush2.bf16.msra.mxu0 0
        %1653 = vmatprep.subr.bf16.mxu0 0
        %1654 = vmatpush2.bf16.msra.mxu0 0
        %1655 = vmatprep.subr.bf16.mxu0 0
        %1656 = vmatpush2.bf16.msra.mxu0 0
        %1657 = vmatprep.subr.bf16.mxu0 0
        %1658 = vmatpush2.bf16.msra.mxu0 0
        %1659 = vmatprep.subr.bf16.mxu0 0
        %1660 = vmatpush2.bf16.msra.mxu0 0
        %1661 = vmatprep.mubr.bf16.mxu0 0
        %1662 = vmatmul.mubr.bf16.gmra.mxu0 %v1520
        %v1663 = vpop.f32.mrf.mxu0
        %v1664 = vadd.f32 %v1542, %v1663
        %v1665 = vpop.f32.mrf.mxu0
        %v1666 = vadd.f32 %v1546, %v1665
        %v1667 = vpop.f32.mrf.mxu0
        %v1668 = vpop.f32.mrf.mxu0
        %1669 = vdwg.mxu0
        %v1670 = vadd.f32 %v1340, %v1664
        %v1671 = vadd.f32 %v1341, %v1666
        %1672 = vst [vmem:[%s378] sm:$0xff] %v1670
        %1673 = vst [vmem:[%s378 + $0x8] sm:$0xff] %v1671
        %s1674 = sand.u32 %s213, 1
        %s1675 = scalar_lea.sflag [#allocation4], %s1674
        %s1676 = sand.u32 %s213, 1
        %s1677 = smul.addr %s1676, 16
        %s1678 = scalar_lea.vmem [#allocation10], %s1677
        // Predicated region
        $region69: #{tpu_custom_call.1} parent=51 // pred_check
          %p1679 = pneg %p223
        $region70: #{tpu_custom_call.1} parent=51 // pred_check_branch
          %1681 = sbr.rel (%p1679) target = $region72
        $region71: #{tpu_custom_call.1} parent=51 // pred_region
          %s1683 = ssub.s32 256, 256
          %1684 = vsyncadd %s1675, %s1683
          %s1685 = smul.addr %s27, 2
          %s1686 = smul.addr %s1685, 128
          %s1687 = scalar_lea.hbm %s8, %s1686
          %s1689 = sshll.u32 %s1678, 4
          %s1690 = int_to_ptr.vmem [resolvable:$true] %s1689
          %1692 = dma.vmem_to_hbm [thread:$0]  %s1690, 256, %s1687, %s1675
        $region72: #{tpu_custom_call.1} parent=51 // pred_fallthru
          _
      $region52: #{tpu_custom_call.1} parent=5 // pred_fallthru
        _
      %p1693 = scmp.le.s32.totalorder 2, %s22
      // Predicated region
      $region73: #{tpu_custom_call.1} parent=5 // pred_check
        %p1694 = pneg %p1693
      $region74: #{tpu_custom_call.1} parent=5 // pred_check_branch
        %1696 = sbr.rel (%p1694) target = $region76
      $region75: #{tpu_custom_call.1} parent=5 // pred_region
        %s1697 = ssub.s32 %s22, 2
        // Predicated region
        $region77: #{tpu_custom_call.1} parent=75 // pred_check
          %p1698 = pneg %p229
        $region78: #{tpu_custom_call.1} parent=75 // pred_check_branch
          %1700 = sbr.rel (%p1698) target = $region80
        $region79: #{tpu_custom_call.1} parent=75 // pred_region
          %s1701 = sand.u32 %s214, 1
          %s1702 = scalar_lea.sflag [#allocation4], %s1701
          %s1703 = sand.u32 %s214, 1
          %s1704 = smul.addr %s1703, 16
          %s1705 = scalar_lea.vmem [#allocation10], %s1704
          %1706 = dma.done %s1702, 256
        $region80: #{tpu_custom_call.1} parent=75 // pred_fallthru
          _
      $region76: #{tpu_custom_call.1} parent=5 // pred_fallthru
        _
    $region6: #{tpu_custom_call.1} parent=1 // loop_footer
      %s26 = sadd.s32 1, %s22
    $region7: #{tpu_custom_call.1} parent=1 // loop_footer_branch
      %21 = sbr.rel target = $region3
    $region8: #{tpu_custom_call.1} parent=1 // loop_exit
      _
    %1707 = vsyncpa [#allocation3], 1
    %s1708 = scalar_lea.sflag [#allocation3], 1
    %1709 = vsyncpa %s1708, 1
    %1710 = vsyncpa [#allocation6], 1
    %1711 = vsyncpa [#allocation9], 1
    %1712 = vsyncpa [#allocation4], 1
    %s1713 = scalar_lea.sflag [#allocation4], 1
    %1714 = vsyncpa %s1713, 1

</llo_original>
